<compile_context>
chip_gen: v7x
topology: tpu7x:2x2x1
jax: 0.10.0
libtpu: 0.0.40
codegen_flags: <defaults>
</compile_context>

<pallas_src>
import jax
import jax.numpy as jnp
from jax.experimental import pallas as pl
from jax.experimental.pallas import tpu as pltpu

EPS = 1e-5


# --------------------------- tap metadata (static) ---------------------------

def _tap_meta(stride, Wout, pad):
    """Per 3x3 tap: (phase index, flat-slice start, need_left_mask, need_right_mask)."""
    meta = []
    for kh in range(3):
        for kw in range(3):
            dh, dw = kh - 1, kw - 1
            if stride == 1:
                ph = 0
                start = pad + dh * Wout + dw
                need_l, need_r = (dw == -1), (dw == +1)
            else:  # stride == 2: 4-phase decomposition, in-phase shifts are {-1, 0}
                a, b = dh % 2, dw % 2
                fr, fc = (dh - a) // 2, (dw - b) // 2
                ph = a * 2 + b
                start = pad + fr * Wout + fc
                need_l, need_r = (dw == -1), False      # 2c+1 <= W-1 always
            meta.append((ph, start, need_l, need_r))
    return meta


# ------------------------------ fused kernel --------------------------------

def _make_kernel(stride, Cin, planes, Wout, Pout, NPH, nb, pad, has_shortcut, cdt):
    taps1 = _tap_meta(stride, Wout, pad)
    taps2 = _tap_meta(1, Wout, pad)

    def kernel(*refs):
        if has_shortcut:
            (x_ref, w1_ref, s1_ref, b1_ref, w2_ref, s2_ref, b2_ref,
             wsc_ref, ssc_ref, bsc_ref, o_ref, x_st, o1_st) = refs
        else:
            (x_ref, w1_ref, s1_ref, b1_ref, w2_ref, s2_ref, b2_ref,
             o_ref, x_st, o1_st) = refs
            wsc_ref = ssc_ref = bsc_ref = None

        # Column-validity masks of the shifted-tap scheme (hoisted: once per step).
        col = jax.lax.broadcasted_iota(jnp.int32, (1, Pout), 1)
        if Wout & (Wout - 1) == 0:
            c_in_row = jnp.bitwise_and(col, Wout - 1)
        else:
            c_in_row = col % Wout
        mask_l = c_in_row != 0
        mask_r = c_in_row != (Wout - 1)

        # Zero only the halo slabs (interiors are fully overwritten every image).
        x_st[:, :, :pad] = jnp.zeros((NPH, Cin, pad), cdt)
        x_st[:, :, pad + Pout:] = jnp.zeros((NPH, Cin, pad), cdt)
        o1_st[:, :pad] = jnp.zeros((planes, pad), cdt)
        o1_st[:, pad + Pout:] = jnp.zeros((planes, pad), cdt)

        s1 = s1_ref[...]
        b1 = b1_ref[...]
        s2 = s2_ref[...]
        b2 = b2_ref[...]

        def masked(d, ml, mr):
            if ml:
                d = jnp.where(mask_l, d, 0.0)
            if mr:
                d = jnp.where(mask_r, d, 0.0)
            return d

        for i in range(nb):                              # images in this batch block
            # stage image i: flat spatial on lanes, channels on sublanes, zero halo
            x_st[:, :, pad:pad + Pout] = x_ref[i].astype(cdt)

            # ---- conv1 (+bn1, relu): transposed per-tap MXU accumulation ----
            acc = jnp.zeros((planes, Pout), jnp.float32)
            for t, (ph, st, ml, mr) in enumerate(taps1):
                d = jnp.dot(w1_ref[t], x_st[ph, :, st:st + Pout],
                            preferred_element_type=jnp.float32)
                acc = acc + masked(d, ml, mr)
            out1 = jnp.maximum(acc * s1 + b1, 0.0)       # (planes, Pout) f32

            # ---- stage out1 in VMEM (no HBM round trip), padded for conv2 ----
            o1_st[:, pad:pad + Pout] = out1.astype(cdt)

            # ---- conv2 (+bn2) ----
            acc2 = jnp.zeros((planes, Pout), jnp.float32)
            for t, (_, st, ml, mr) in enumerate(taps2):
                d = jnp.dot(w2_ref[t], o1_st[:, st:st + Pout],
                            preferred_element_type=jnp.float32)
                acc2 = acc2 + masked(d, ml, mr)
            out2 = acc2 * s2 + b2                        # (planes, Pout) f32

            # ---- shortcut (identity or fused 1x1 conv + BN), residual, relu ----
            xc = x_ref[i, 0]                             # (Cin, Pout), input dtype
            if has_shortcut:
                sc = jnp.dot(wsc_ref[...], xc.astype(cdt),
                             preferred_element_type=jnp.float32)
                sc = sc * ssc_ref[...] + bsc_ref[...]
            else:
                sc = xc.astype(jnp.float32)              # identity: Cin == planes

            # store directly as (planes, spatial): NCHW-contiguous, no transpose
            o_ref[i] = jnp.maximum(out2 + sc, 0.0).astype(o_ref.dtype)

    return kernel


# ------------------------------ JAX wrapper ----------------------------------

def _fold_bn(bn, planes):
    g, b, m, v = bn
    s = g / jnp.sqrt(v + EPS)
    return (s.reshape(planes, 1).astype(jnp.float32),
            (b - m * s).reshape(planes, 1).astype(jnp.float32))


def _pick_batch_block(N):
    # amortize per-step overhead, but keep >= 2 grid steps for v7x's 2 TensorCores
    for cand in (8, 4, 2):
        if N % cand == 0 and N // cand >= 2:
            return cand
    return 1


def basic_block_forward(x_nchw, p, compute_dtype=jnp.float32, out_dtype=None,
                        batch_block=None):
    stride, planes = p["stride"], p["planes"]
    N, Cin, H, W = x_nchw.shape
    S = stride
    Hout, Wout = H // S, W // S
    Pout = Hout * Wout
    NPH = S * S
    pad = Wout + 1
    Lx = Pout + 2 * pad
    out_dtype = x_nchw.dtype if out_dtype is None else out_dtype
    if not p["has_shortcut"]:
        assert S == 1 and Cin == planes

    # Input prep: NO transpose, NO HBM pad. Stride 1 is a free reshape of the
    # contiguous NCHW array; stride 2 keeps a single strided phase-gather pass.
    if S == 1:
        xk = x_nchw.reshape(N, 1, Cin, Pout)
    else:
        assert S == 2 and H % 2 == 0 and W % 2 == 0, "stride must be 1 or 2, even H/W"
        phases = [x_nchw[:, :, a::2, b::2] for a in (0, 1) for b in (0, 1)]
        xk = jnp.stack(phases, axis=1).reshape(N, 4, Cin, Pout)

    nb = _pick_batch_block(N) if batch_block is None else batch_block
    assert N % nb == 0

    # BN kept OUT of the (possibly bf16) weights; f32 scale/bias in the epilogue.
    s1, b1 = _fold_bn(p["bn1"], planes)
    s2, b2 = _fold_bn(p["bn2"], planes)
    w1 = jnp.transpose(p["w1"], (2, 3, 0, 1)).reshape(9, planes, Cin).astype(compute_dtype)
    w2 = jnp.transpose(p["w2"], (2, 3, 0, 1)).reshape(9, planes, planes).astype(compute_dtype)

    args = [xk, w1, s1, b1, w2, s2, b2]
    in_specs = [
        pl.BlockSpec((nb, NPH, Cin, Pout), lambda n: (n, 0, 0, 0)),
        pl.BlockSpec((9, planes, Cin), lambda n: (0, 0, 0)),
        pl.BlockSpec((planes, 1), lambda n: (0, 0)),
        pl.BlockSpec((planes, 1), lambda n: (0, 0)),
        pl.BlockSpec((9, planes, planes), lambda n: (0, 0, 0)),
        pl.BlockSpec((planes, 1), lambda n: (0, 0)),
        pl.BlockSpec((planes, 1), lambda n: (0, 0)),
    ]
    if p["has_shortcut"]:
        ssc, bsc = _fold_bn(p["bnsc"], planes)
        wsc = p["wsc"].reshape(planes, Cin).astype(compute_dtype)
        args += [wsc, ssc, bsc]
        in_specs += [
            pl.BlockSpec((planes, Cin), lambda n: (0, 0)),
            pl.BlockSpec((planes, 1), lambda n: (0, 0)),
            pl.BlockSpec((planes, 1), lambda n: (0, 0)),
        ]

    kernel = _make_kernel(stride, Cin, planes, Wout, Pout, NPH, nb, pad,
                          p["has_shortcut"], compute_dtype)

    out = pl.pallas_call(
        kernel,
        out_shape=jax.ShapeDtypeStruct((N, planes, Pout), out_dtype),
        grid=(N // nb,),
        in_specs=in_specs,
        out_specs=pl.BlockSpec((nb, planes, Pout), lambda n: (n, 0, 0)),
        scratch_shapes=[pltpu.VMEM((NPH, Cin, Lx), compute_dtype),
                        pltpu.VMEM((planes, Lx), compute_dtype)],
        compiler_params=pltpu.CompilerParams(
            dimension_semantics=("parallel",)),           # batch shards across TCs
    )(*args)

    return out.reshape(N, planes, Hout, Wout)             # NCHW, already contiguous


# ------------------------------ params init ---------------------------------

def init_basic_block(key, in_planes, planes, stride):
    ks = jax.random.split(key, 16)
    p = {"stride": stride, "in_planes": in_planes, "planes": planes}
    p["w1"] = jax.random.normal(ks[0], (planes, in_planes, 3, 3), jnp.float32) * 0.1
    p["bn1"] = (0.5 + jax.random.uniform(ks[1], (planes,), jnp.float32),
                jax.random.normal(ks[2], (planes,), jnp.float32) * 0.1,
                jax.random.normal(ks[3], (planes,), jnp.float32) * 0.1,
                0.5 + jax.random.uniform(ks[4], (planes,), jnp.float32))
    p["w2"] = jax.random.normal(ks[5], (planes, planes, 3, 3), jnp.float32) * 0.1
    p["bn2"] = (0.5 + jax.random.uniform(ks[6], (planes,), jnp.float32),
                jax.random.normal(ks[7], (planes,), jnp.float32) * 0.1,
                jax.random.normal(ks[8], (planes,), jnp.float32) * 0.1,
                0.5 + jax.random.uniform(ks[9], (planes,), jnp.float32))
    p["has_shortcut"] = (stride != 1) or (in_planes != planes)
    if p["has_shortcut"]:
        p["wsc"] = jax.random.normal(ks[10], (planes, in_planes, 1, 1), jnp.float32) * 0.1
        p["bnsc"] = (0.5 + jax.random.uniform(ks[11], (planes,), jnp.float32),
                     jax.random.normal(ks[12], (planes,), jnp.float32) * 0.1,
                     jax.random.normal(ks[13], (planes,), jnp.float32) * 0.1,
                     0.5 + jax.random.uniform(ks[14], (planes,), jnp.float32))
    return p


# ------------------------- pure-JAX reference (NCHW) -------------------------

def _ref_conv(x, w, stride):
    pad = ((1, 1), (1, 1)) if w.shape[-1] == 3 else ((0, 0), (0, 0))
    return jax.lax.conv_general_dilated(
        x, w, window_strides=(stride, stride), padding=pad,
        dimension_numbers=("NCHW", "OIHW", "NCHW"))


def _ref_bn(x, bn):
    g, b, m, v = bn
    s = g / jnp.sqrt(v + EPS)
    return x * s[None, :, None, None] + (b - m * s)[None, :, None, None]


def basic_block_reference(x, p):
    out = jnp.maximum(_ref_bn(_ref_conv(x, p["w1"], p["stride"]), p["bn1"]), 0.0)
    out = _ref_bn(_ref_conv(out, p["w2"], 1), p["bn2"])
    if p["has_shortcut"]:
        short = _ref_bn(_ref_conv(x, p["wsc"], p["stride"]), p["bnsc"])
    else:
        short = x
    return jnp.maximum(out + short, 0.0)


# ---------------------------------- main -------------------------------------

if __name__ == "__main__":
    key = jax.random.PRNGKey(0)
    kx, kA, kB = jax.random.split(key, 3)

    x = jax.random.normal(kx, (2, 4, 16, 16), jnp.float32)   # NCHW input

    # Block A: downsample path (stride=2, Cin != planes -> 1x1-conv shortcut)
    pA = init_basic_block(kA, in_planes=4, planes=8, stride=2)
    # Block B: identity shortcut (stride=1, Cin == planes)
    pB = init_basic_block(kB, in_planes=4, planes=4, stride=1)

    refA = basic_block_reference(x, pA)
    refB = basic_block_reference(x, pB)

    # f32 matmul path: exact module semantics.
    yA = jax.block_until_ready(basic_block_forward(x, pA, compute_dtype=jnp.float32))
    yB = jax.block_until_ready(basic_block_forward(x, pB, compute_dtype=jnp.float32))
    assert yA.shape == (2, 8, 8, 8)
    assert yB.shape == (2, 4, 16, 16)
    assert jnp.allclose(yA, refA, atol=1e-3, rtol=1e-3)
    assert jnp.allclose(yB, refB, atol=1e-3, rtol=1e-3)

    # bf16 matmul inputs, f32 accumulation + f32 BN epilogue (v6e/v7x fast path).
    yA16 = jax.block_until_ready(basic_block_forward(x, pA, compute_dtype=jnp.bfloat16))
    yB16 = jax.block_until_ready(basic_block_forward(x, pB, compute_dtype=jnp.bfloat16))
    assert jnp.allclose(yA16, refA, atol=1e-1, rtol=5e-2)
    assert jnp.allclose(yB16, refB, atol=1e-1, rtol=5e-2)

    print("KERNEL_OK")
</pallas_src>

<mosaic_0001>
module attributes {stable_mosaic.version = 11 : i64} {
  func.func @kernel(%arg0: i32, %arg1: memref<1x4x4x64xf32, #tpu.memory_space<vmem>>, %arg2: memref<9x8x4xf32, #tpu.memory_space<vmem>>, %arg3: memref<8x1xf32, #tpu.memory_space<vmem>>, %arg4: memref<8x1xf32, #tpu.memory_space<vmem>>, %arg5: memref<9x8x8xf32, #tpu.memory_space<vmem>>, %arg6: memref<8x1xf32, #tpu.memory_space<vmem>>, %arg7: memref<8x1xf32, #tpu.memory_space<vmem>>, %arg8: memref<8x4xf32, #tpu.memory_space<vmem>>, %arg9: memref<8x1xf32, #tpu.memory_space<vmem>>, %arg10: memref<8x1xf32, #tpu.memory_space<vmem>>, %arg11: memref<1x8x64xf32, #tpu.memory_space<vmem>>, %arg12: memref<4x4x82xf32, #tpu.memory_space<vmem>>, %arg13: memref<8x82xf32, #tpu.memory_space<vmem>>) attributes {dimension_semantics = [#tpu.dimension_semantics<parallel>], iteration_bounds = array<i64: 2>, scalar_prefetch = 0 : i64, scratch_operands = 2 : i64, tpu.core_type = #tpu.core_type<tc>, window_params = [{transform_indices = @transform_0, window_bounds = array<i64: 1, 4, 4, 64>}, {pipeline_mode = #tpu.pipeline_mode<synchronous>, transform_indices = @transform_1, window_bounds = array<i64: 9, 8, 4>}, {pipeline_mode = #tpu.pipeline_mode<synchronous>, transform_indices = @transform_2, window_bounds = array<i64: 8, 1>}, {pipeline_mode = #tpu.pipeline_mode<synchronous>, transform_indices = @transform_3, window_bounds = array<i64: 8, 1>}, {pipeline_mode = #tpu.pipeline_mode<synchronous>, transform_indices = @transform_4, window_bounds = array<i64: 9, 8, 8>}, {pipeline_mode = #tpu.pipeline_mode<synchronous>, transform_indices = @transform_5, window_bounds = array<i64: 8, 1>}, {pipeline_mode = #tpu.pipeline_mode<synchronous>, transform_indices = @transform_6, window_bounds = array<i64: 8, 1>}, {pipeline_mode = #tpu.pipeline_mode<synchronous>, transform_indices = @transform_7, window_bounds = array<i64: 8, 4>}, {pipeline_mode = #tpu.pipeline_mode<synchronous>, transform_indices = @transform_8, window_bounds = array<i64: 8, 1>}, {pipeline_mode = #tpu.pipeline_mode<synchronous>, transform_indices = @transform_9, window_bounds = array<i64: 8, 1>}, {transform_indices = @transform_10, window_bounds = array<i64: 1, 8, 64>}]} {
    %0 = tpu.iota {dimensions = array<i32: 1>} : vector<1x64xi32>
    %c7_i32 = arith.constant 7 : i32
    %1 = vector.broadcast %c7_i32 : i32 to vector<1x64xi32>
    %2 = arith.andi %0, %1 : vector<1x64xi32>
    %c0_i32 = arith.constant 0 : i32
    %3 = vector.broadcast %c0_i32 : i32 to vector<1x64xi32>
    %4 = arith.cmpi ne, %2, %3 : vector<1x64xi32>
    %c7_i32_0 = arith.constant 7 : i32
    %5 = vector.broadcast %c7_i32_0 : i32 to vector<1x64xi32>
    %6 = arith.cmpi ne, %2, %5 : vector<1x64xi32>
    %cst = arith.constant 0.000000e+00 : f32
    %7 = vector.broadcast %cst : f32 to vector<4x4x9xf32>
    %c0 = arith.constant 0 : index
    %c0_1 = arith.constant 0 : index
    %c0_2 = arith.constant 0 : index
    %8 = vector.load %arg12[%c0, %c0_1, %c0_2] : memref<4x4x82xf32, #tpu.memory_space<vmem>>, vector<4x4x9xf32>
    tpu.vector_store %arg12[%c0, %c0_1, %c0_2], %7 {strides = array<i32>} : memref<4x4x82xf32, #tpu.memory_space<vmem>>, vector<4x4x9xf32>,
    %cst_3 = arith.constant 0.000000e+00 : f32
    %9 = vector.broadcast %cst_3 : f32 to vector<4x4x9xf32>
    %c0_4 = arith.constant 0 : index
    %c0_5 = arith.constant 0 : index
    %c73 = arith.constant 73 : index
    %10 = vector.load %arg12[%c0_4, %c0_5, %c73] : memref<4x4x82xf32, #tpu.memory_space<vmem>>, vector<4x4x9xf32>
    tpu.vector_store %arg12[%c0_4, %c0_5, %c73], %9 {strides = array<i32>} : memref<4x4x82xf32, #tpu.memory_space<vmem>>, vector<4x4x9xf32>,
    %cst_6 = arith.constant 0.000000e+00 : f32
    %11 = vector.broadcast %cst_6 : f32 to vector<8x9xf32>
    %c0_7 = arith.constant 0 : index
    %c0_8 = arith.constant 0 : index
    %12 = vector.load %arg13[%c0_7, %c0_8] : memref<8x82xf32, #tpu.memory_space<vmem>>, vector<8x9xf32>
    tpu.vector_store %arg13[%c0_7, %c0_8], %11 {strides = array<i32>} : memref<8x82xf32, #tpu.memory_space<vmem>>, vector<8x9xf32>,
    %cst_9 = arith.constant 0.000000e+00 : f32
    %13 = vector.broadcast %cst_9 : f32 to vector<8x9xf32>
    %c0_10 = arith.constant 0 : index
    %c73_11 = arith.constant 73 : index
    %14 = vector.load %arg13[%c0_10, %c73_11] : memref<8x82xf32, #tpu.memory_space<vmem>>, vector<8x9xf32>
    tpu.vector_store %arg13[%c0_10, %c73_11], %13 {strides = array<i32>} : memref<8x82xf32, #tpu.memory_space<vmem>>, vector<8x9xf32>,
    %c0_12 = arith.constant 0 : index
    %c0_13 = arith.constant 0 : index
    %15 = vector.load %arg3[%c0_12, %c0_13] : memref<8x1xf32, #tpu.memory_space<vmem>>, vector<8x1xf32>
    %c0_14 = arith.constant 0 : index
    %c0_15 = arith.constant 0 : index
    %16 = vector.load %arg4[%c0_14, %c0_15] : memref<8x1xf32, #tpu.memory_space<vmem>>, vector<8x1xf32>
    %c0_16 = arith.constant 0 : index
    %c0_17 = arith.constant 0 : index
    %17 = vector.load %arg6[%c0_16, %c0_17] : memref<8x1xf32, #tpu.memory_space<vmem>>, vector<8x1xf32>
    %c0_18 = arith.constant 0 : index
    %c0_19 = arith.constant 0 : index
    %18 = vector.load %arg7[%c0_18, %c0_19] : memref<8x1xf32, #tpu.memory_space<vmem>>, vector<8x1xf32>
    %c0_20 = arith.constant 0 : index
    %c0_21 = arith.constant 0 : index
    %c0_22 = arith.constant 0 : index
    %c0_23 = arith.constant 0 : index
    %19 = vector.load %arg1[%c0_20, %c0_21, %c0_22, %c0_23] : memref<1x4x4x64xf32, #tpu.memory_space<vmem>>, vector<1x4x4x64xf32>
    %20 = vector.shape_cast %19 : vector<1x4x4x64xf32> to vector<4x4x64xf32>
    %c0_24 = arith.constant 0 : index
    %c0_25 = arith.constant 0 : index
    %c9 = arith.constant 9 : index
    %21 = vector.load %arg12[%c0_24, %c0_25, %c9] : memref<4x4x82xf32, #tpu.memory_space<vmem>>, vector<4x4x64xf32>
    tpu.vector_store %arg12[%c0_24, %c0_25, %c9], %20 {strides = array<i32>} : memref<4x4x82xf32, #tpu.memory_space<vmem>>, vector<4x4x64xf32>,
    %cst_26 = arith.constant 0.000000e+00 : f32
    %22 = vector.broadcast %cst_26 : f32 to vector<8x64xf32>
    %c0_27 = arith.constant 0 : index
    %c0_28 = arith.constant 0 : index
    %c0_29 = arith.constant 0 : index
    %23 = vector.load %arg2[%c0_27, %c0_28, %c0_29] : memref<9x8x4xf32, #tpu.memory_space<vmem>>, vector<1x8x4xf32>
    %24 = vector.shape_cast %23 : vector<1x8x4xf32> to vector<8x4xf32>
    %c3 = arith.constant 3 : index
    %c0_30 = arith.constant 0 : index
    %c0_31 = arith.constant 0 : index
    %25 = vector.load %arg12[%c3, %c0_30, %c0_31] : memref<4x4x82xf32, #tpu.memory_space<vmem>>, vector<1x4x64xf32>
    %26 = vector.shape_cast %25 : vector<1x4x64xf32> to vector<4x64xf32>
    %cst_32 = arith.constant dense<0.000000e+00> : vector<8x64xf32>
    %27 = tpu.matmul %24, %26, %cst_32 {dimension_numbers = #tpu.dot_dimension_numbers<[1], [0], [0], [1], [0, 0, 1, 1], [], []>} : vector<8x4xf32>, vector<4x64xf32>, vector<8x64xf32> -> vector<8x64xf32>
    %cst_33 = arith.constant 0.000000e+00 : f32
    %28 = vector.shape_cast %4 : vector<1x64xi1> to vector<1x64xi1>
    %29 = vector.broadcast %28 : vector<1x64xi1> to vector<8x64xi1>
    %30 = vector.broadcast %cst_33 : f32 to vector<8x64xf32>
    %31 = arith.select %29, %27, %30 : vector<8x64xi1>, vector<8x64xf32>
    %32 = arith.addf %22, %31 : vector<8x64xf32>
    %c1 = arith.constant 1 : index
    %c0_34 = arith.constant 0 : index
    %c0_35 = arith.constant 0 : index
    %33 = vector.load %arg2[%c1, %c0_34, %c0_35] : memref<9x8x4xf32, #tpu.memory_space<vmem>>, vector<1x8x4xf32>
    %34 = vector.shape_cast %33 : vector<1x8x4xf32> to vector<8x4xf32>
    %c2 = arith.constant 2 : index
    %c0_36 = arith.constant 0 : index
    %c1_37 = arith.constant 1 : index
    %35 = vector.load %arg12[%c2, %c0_36, %c1_37] : memref<4x4x82xf32, #tpu.memory_space<vmem>>, vector<1x4x64xf32>
    %36 = vector.shape_cast %35 : vector<1x4x64xf32> to vector<4x64xf32>
    %cst_38 = arith.constant dense<0.000000e+00> : vector<8x64xf32>
    %37 = tpu.matmul %34, %36, %cst_38 {dimension_numbers = #tpu.dot_dimension_numbers<[1], [0], [0], [1], [0, 0, 1, 1], [], []>} : vector<8x4xf32>, vector<4x64xf32>, vector<8x64xf32> -> vector<8x64xf32>
    %38 = arith.addf %32, %37 : vector<8x64xf32>
    %c2_39 = arith.constant 2 : index
    %c0_40 = arith.constant 0 : index
    %c0_41 = arith.constant 0 : index
    %39 = vector.load %arg2[%c2_39, %c0_40, %c0_41] : memref<9x8x4xf32, #tpu.memory_space<vmem>>, vector<1x8x4xf32>
    %40 = vector.shape_cast %39 : vector<1x8x4xf32> to vector<8x4xf32>
    %c3_42 = arith.constant 3 : index
    %c0_43 = arith.constant 0 : index
    %c1_44 = arith.constant 1 : index
    %41 = vector.load %arg12[%c3_42, %c0_43, %c1_44] : memref<4x4x82xf32, #tpu.memory_space<vmem>>, vector<1x4x64xf32>
    %42 = vector.shape_cast %41 : vector<1x4x64xf32> to vector<4x64xf32>
    %cst_45 = arith.constant dense<0.000000e+00> : vector<8x64xf32>
    %43 = tpu.matmul %40, %42, %cst_45 {dimension_numbers = #tpu.dot_dimension_numbers<[1], [0], [0], [1], [0, 0, 1, 1], [], []>} : vector<8x4xf32>, vector<4x64xf32>, vector<8x64xf32> -> vector<8x64xf32>
    %44 = arith.addf %38, %43 : vector<8x64xf32>
    %c3_46 = arith.constant 3 : index
    %c0_47 = arith.constant 0 : index
    %c0_48 = arith.constant 0 : index
    %45 = vector.load %arg2[%c3_46, %c0_47, %c0_48] : memref<9x8x4xf32, #tpu.memory_space<vmem>>, vector<1x8x4xf32>
    %46 = vector.shape_cast %45 : vector<1x8x4xf32> to vector<8x4xf32>
    %c1_49 = arith.constant 1 : index
    %c0_50 = arith.constant 0 : index
    %c8 = arith.constant 8 : index
    %47 = vector.load %arg12[%c1_49, %c0_50, %c8] : memref<4x4x82xf32, #tpu.memory_space<vmem>>, vector<1x4x64xf32>
    %48 = vector.shape_cast %47 : vector<1x4x64xf32> to vector<4x64xf32>
    %cst_51 = arith.constant dense<0.000000e+00> : vector<8x64xf32>
    %49 = tpu.matmul %46, %48, %cst_51 {dimension_numbers = #tpu.dot_dimension_numbers<[1], [0], [0], [1], [0, 0, 1, 1], [], []>} : vector<8x4xf32>, vector<4x64xf32>, vector<8x64xf32> -> vector<8x64xf32>
    %cst_52 = arith.constant 0.000000e+00 : f32
    %50 = vector.shape_cast %4 : vector<1x64xi1> to vector<1x64xi1>
    %51 = vector.broadcast %50 : vector<1x64xi1> to vector<8x64xi1>
    %52 = vector.broadcast %cst_52 : f32 to vector<8x64xf32>
    %53 = arith.select %51, %49, %52 : vector<8x64xi1>, vector<8x64xf32>
    %54 = arith.addf %44, %53 : vector<8x64xf32>
    %c4 = arith.constant 4 : index
    %c0_53 = arith.constant 0 : index
    %c0_54 = arith.constant 0 : index
    %55 = vector.load %arg2[%c4, %c0_53, %c0_54] : memref<9x8x4xf32, #tpu.memory_space<vmem>>, vector<1x8x4xf32>
    %56 = vector.shape_cast %55 : vector<1x8x4xf32> to vector<8x4xf32>
    %c0_55 = arith.constant 0 : index
    %c0_56 = arith.constant 0 : index
    %c9_57 = arith.constant 9 : index
    %57 = vector.load %arg12[%c0_55, %c0_56, %c9_57] : memref<4x4x82xf32, #tpu.memory_space<vmem>>, vector<1x4x64xf32>
    %58 = vector.shape_cast %57 : vector<1x4x64xf32> to vector<4x64xf32>
    %cst_58 = arith.constant dense<0.000000e+00> : vector<8x64xf32>
    %59 = tpu.matmul %56, %58, %cst_58 {dimension_numbers = #tpu.dot_dimension_numbers<[1], [0], [0], [1], [0, 0, 1, 1], [], []>} : vector<8x4xf32>, vector<4x64xf32>, vector<8x64xf32> -> vector<8x64xf32>
    %60 = arith.addf %54, %59 : vector<8x64xf32>
    %c5 = arith.constant 5 : index
    %c0_59 = arith.constant 0 : index
    %c0_60 = arith.constant 0 : index
    %61 = vector.load %arg2[%c5, %c0_59, %c0_60] : memref<9x8x4xf32, #tpu.memory_space<vmem>>, vector<1x8x4xf32>
    %62 = vector.shape_cast %61 : vector<1x8x4xf32> to vector<8x4xf32>
    %c1_61 = arith.constant 1 : index
    %c0_62 = arith.constant 0 : index
    %c9_63 = arith.constant 9 : index
    %63 = vector.load %arg12[%c1_61, %c0_62, %c9_63] : memref<4x4x82xf32, #tpu.memory_space<vmem>>, vector<1x4x64xf32>
    %64 = vector.shape_cast %63 : vector<1x4x64xf32> to vector<4x64xf32>
    %cst_64 = arith.constant dense<0.000000e+00> : vector<8x64xf32>
    %65 = tpu.matmul %62, %64, %cst_64 {dimension_numbers = #tpu.dot_dimension_numbers<[1], [0], [0], [1], [0, 0, 1, 1], [], []>} : vector<8x4xf32>, vector<4x64xf32>, vector<8x64xf32> -> vector<8x64xf32>
    %66 = arith.addf %60, %65 : vector<8x64xf32>
    %c6 = arith.constant 6 : index
    %c0_65 = arith.constant 0 : index
    %c0_66 = arith.constant 0 : index
    %67 = vector.load %arg2[%c6, %c0_65, %c0_66] : memref<9x8x4xf32, #tpu.memory_space<vmem>>, vector<1x8x4xf32>
    %68 = vector.shape_cast %67 : vector<1x8x4xf32> to vector<8x4xf32>
    %c3_67 = arith.constant 3 : index
    %c0_68 = arith.constant 0 : index
    %c8_69 = arith.constant 8 : index
    %69 = vector.load %arg12[%c3_67, %c0_68, %c8_69] : memref<4x4x82xf32, #tpu.memory_space<vmem>>, vector<1x4x64xf32>
    %70 = vector.shape_cast %69 : vector<1x4x64xf32> to vector<4x64xf32>
    %cst_70 = arith.constant dense<0.000000e+00> : vector<8x64xf32>
    %71 = tpu.matmul %68, %70, %cst_70 {dimension_numbers = #tpu.dot_dimension_numbers<[1], [0], [0], [1], [0, 0, 1, 1], [], []>} : vector<8x4xf32>, vector<4x64xf32>, vector<8x64xf32> -> vector<8x64xf32>
    %cst_71 = arith.constant 0.000000e+00 : f32
    %72 = vector.shape_cast %4 : vector<1x64xi1> to vector<1x64xi1>
    %73 = vector.broadcast %72 : vector<1x64xi1> to vector<8x64xi1>
    %74 = vector.broadcast %cst_71 : f32 to vector<8x64xf32>
    %75 = arith.select %73, %71, %74 : vector<8x64xi1>, vector<8x64xf32>
    %76 = arith.addf %66, %75 : vector<8x64xf32>
    %c7 = arith.constant 7 : index
    %c0_72 = arith.constant 0 : index
    %c0_73 = arith.constant 0 : index
    %77 = vector.load %arg2[%c7, %c0_72, %c0_73] : memref<9x8x4xf32, #tpu.memory_space<vmem>>, vector<1x8x4xf32>
    %78 = vector.shape_cast %77 : vector<1x8x4xf32> to vector<8x4xf32>
    %c2_74 = arith.constant 2 : index
    %c0_75 = arith.constant 0 : index
    %c9_76 = arith.constant 9 : index
    %79 = vector.load %arg12[%c2_74, %c0_75, %c9_76] : memref<4x4x82xf32, #tpu.memory_space<vmem>>, vector<1x4x64xf32>
    %80 = vector.shape_cast %79 : vector<1x4x64xf32> to vector<4x64xf32>
    %cst_77 = arith.constant dense<0.000000e+00> : vector<8x64xf32>
    %81 = tpu.matmul %78, %80, %cst_77 {dimension_numbers = #tpu.dot_dimension_numbers<[1], [0], [0], [1], [0, 0, 1, 1], [], []>} : vector<8x4xf32>, vector<4x64xf32>, vector<8x64xf32> -> vector<8x64xf32>
    %82 = arith.addf %76, %81 : vector<8x64xf32>
    %c8_78 = arith.constant 8 : index
    %c0_79 = arith.constant 0 : index
    %c0_80 = arith.constant 0 : index
    %83 = vector.load %arg2[%c8_78, %c0_79, %c0_80] : memref<9x8x4xf32, #tpu.memory_space<vmem>>, vector<1x8x4xf32>
    %84 = vector.shape_cast %83 : vector<1x8x4xf32> to vector<8x4xf32>
    %c3_81 = arith.constant 3 : index
    %c0_82 = arith.constant 0 : index
    %c9_83 = arith.constant 9 : index
    %85 = vector.load %arg12[%c3_81, %c0_82, %c9_83] : memref<4x4x82xf32, #tpu.memory_space<vmem>>, vector<1x4x64xf32>
    %86 = vector.shape_cast %85 : vector<1x4x64xf32> to vector<4x64xf32>
    %cst_84 = arith.constant dense<0.000000e+00> : vector<8x64xf32>
    %87 = tpu.matmul %84, %86, %cst_84 {dimension_numbers = #tpu.dot_dimension_numbers<[1], [0], [0], [1], [0, 0, 1, 1], [], []>} : vector<8x4xf32>, vector<4x64xf32>, vector<8x64xf32> -> vector<8x64xf32>
    %88 = arith.addf %82, %87 : vector<8x64xf32>
    %89 = vector.broadcast %15 : vector<8x1xf32> to vector<8x64xf32>
    %90 = arith.mulf %88, %89 : vector<8x64xf32>
    %91 = vector.broadcast %16 : vector<8x1xf32> to vector<8x64xf32>
    %92 = arith.addf %90, %91 : vector<8x64xf32>
    %cst_85 = arith.constant 0.000000e+00 : f32
    %93 = vector.broadcast %cst_85 : f32 to vector<8x64xf32>
    %94 = arith.maximumf %92, %93 : vector<8x64xf32>
    %c0_86 = arith.constant 0 : index
    %c9_87 = arith.constant 9 : index
    %95 = vector.load %arg13[%c0_86, %c9_87] : memref<8x82xf32, #tpu.memory_space<vmem>>, vector<8x64xf32>
    tpu.vector_store %arg13[%c0_86, %c9_87], %94 {strides = array<i32>} : memref<8x82xf32, #tpu.memory_space<vmem>>, vector<8x64xf32>,
    %cst_88 = arith.constant 0.000000e+00 : f32
    %96 = vector.broadcast %cst_88 : f32 to vector<8x64xf32>
    %c0_89 = arith.constant 0 : index
    %c0_90 = arith.constant 0 : index
    %c0_91 = arith.constant 0 : index
    %97 = vector.load %arg5[%c0_89, %c0_90, %c0_91] : memref<9x8x8xf32, #tpu.memory_space<vmem>>, vector<1x8x8xf32>
    %98 = vector.shape_cast %97 : vector<1x8x8xf32> to vector<8x8xf32>
    %c0_92 = arith.constant 0 : index
    %c0_93 = arith.constant 0 : index
    %99 = vector.load %arg13[%c0_92, %c0_93] : memref<8x82xf32, #tpu.memory_space<vmem>>, vector<8x64xf32>
    %cst_94 = arith.constant dense<0.000000e+00> : vector<8x64xf32>
    %100 = tpu.matmul %98, %99, %cst_94 {dimension_numbers = #tpu.dot_dimension_numbers<[1], [0], [0], [1], [0, 0, 1, 1], [], []>} : vector<8x8xf32>, vector<8x64xf32>, vector<8x64xf32> -> vector<8x64xf32>
    %cst_95 = arith.constant 0.000000e+00 : f32
    %101 = vector.shape_cast %4 : vector<1x64xi1> to vector<1x64xi1>
    %102 = vector.broadcast %101 : vector<1x64xi1> to vector<8x64xi1>
    %103 = vector.broadcast %cst_95 : f32 to vector<8x64xf32>
    %104 = arith.select %102, %100, %103 : vector<8x64xi1>, vector<8x64xf32>
    %105 = arith.addf %96, %104 : vector<8x64xf32>
    %c1_96 = arith.constant 1 : index
    %c0_97 = arith.constant 0 : index
    %c0_98 = arith.constant 0 : index
    %106 = vector.load %arg5[%c1_96, %c0_97, %c0_98] : memref<9x8x8xf32, #tpu.memory_space<vmem>>, vector<1x8x8xf32>
    %107 = vector.shape_cast %106 : vector<1x8x8xf32> to vector<8x8xf32>
    %c0_99 = arith.constant 0 : index
    %c1_100 = arith.constant 1 : index
    %108 = vector.load %arg13[%c0_99, %c1_100] : memref<8x82xf32, #tpu.memory_space<vmem>>, vector<8x64xf32>
    %cst_101 = arith.constant dense<0.000000e+00> : vector<8x64xf32>
    %109 = tpu.matmul %107, %108, %cst_101 {dimension_numbers = #tpu.dot_dimension_numbers<[1], [0], [0], [1], [0, 0, 1, 1], [], []>} : vector<8x8xf32>, vector<8x64xf32>, vector<8x64xf32> -> vector<8x64xf32>
    %110 = arith.addf %105, %109 : vector<8x64xf32>
    %c2_102 = arith.constant 2 : index
    %c0_103 = arith.constant 0 : index
    %c0_104 = arith.constant 0 : index
    %111 = vector.load %arg5[%c2_102, %c0_103, %c0_104] : memref<9x8x8xf32, #tpu.memory_space<vmem>>, vector<1x8x8xf32>
    %112 = vector.shape_cast %111 : vector<1x8x8xf32> to vector<8x8xf32>
    %c0_105 = arith.constant 0 : index
    %c2_106 = arith.constant 2 : index
    %113 = vector.load %arg13[%c0_105, %c2_106] : memref<8x82xf32, #tpu.memory_space<vmem>>, vector<8x64xf32>
    %cst_107 = arith.constant dense<0.000000e+00> : vector<8x64xf32>
    %114 = tpu.matmul %112, %113, %cst_107 {dimension_numbers = #tpu.dot_dimension_numbers<[1], [0], [0], [1], [0, 0, 1, 1], [], []>} : vector<8x8xf32>, vector<8x64xf32>, vector<8x64xf32> -> vector<8x64xf32>
    %cst_108 = arith.constant 0.000000e+00 : f32
    %115 = vector.shape_cast %6 : vector<1x64xi1> to vector<1x64xi1>
    %116 = vector.broadcast %115 : vector<1x64xi1> to vector<8x64xi1>
    %117 = vector.broadcast %cst_108 : f32 to vector<8x64xf32>
    %118 = arith.select %116, %114, %117 : vector<8x64xi1>, vector<8x64xf32>
    %119 = arith.addf %110, %118 : vector<8x64xf32>
    %c3_109 = arith.constant 3 : index
    %c0_110 = arith.constant 0 : index
    %c0_111 = arith.constant 0 : index
    %120 = vector.load %arg5[%c3_109, %c0_110, %c0_111] : memref<9x8x8xf32, #tpu.memory_space<vmem>>, vector<1x8x8xf32>
    %121 = vector.shape_cast %120 : vector<1x8x8xf32> to vector<8x8xf32>
    %c0_112 = arith.constant 0 : index
    %c8_113 = arith.constant 8 : index
    %122 = vector.load %arg13[%c0_112, %c8_113] : memref<8x82xf32, #tpu.memory_space<vmem>>, vector<8x64xf32>
    %cst_114 = arith.constant dense<0.000000e+00> : vector<8x64xf32>
    %123 = tpu.matmul %121, %122, %cst_114 {dimension_numbers = #tpu.dot_dimension_numbers<[1], [0], [0], [1], [0, 0, 1, 1], [], []>} : vector<8x8xf32>, vector<8x64xf32>, vector<8x64xf32> -> vector<8x64xf32>
    %cst_115 = arith.constant 0.000000e+00 : f32
    %124 = vector.shape_cast %4 : vector<1x64xi1> to vector<1x64xi1>
    %125 = vector.broadcast %124 : vector<1x64xi1> to vector<8x64xi1>
    %126 = vector.broadcast %cst_115 : f32 to vector<8x64xf32>
    %127 = arith.select %125, %123, %126 : vector<8x64xi1>, vector<8x64xf32>
    %128 = arith.addf %119, %127 : vector<8x64xf32>
    %c4_116 = arith.constant 4 : index
    %c0_117 = arith.constant 0 : index
    %c0_118 = arith.constant 0 : index
    %129 = vector.load %arg5[%c4_116, %c0_117, %c0_118] : memref<9x8x8xf32, #tpu.memory_space<vmem>>, vector<1x8x8xf32>
    %130 = vector.shape_cast %129 : vector<1x8x8xf32> to vector<8x8xf32>
    %c0_119 = arith.constant 0 : index
    %c9_120 = arith.constant 9 : index
    %131 = vector.load %arg13[%c0_119, %c9_120] : memref<8x82xf32, #tpu.memory_space<vmem>>, vector<8x64xf32>
    %cst_121 = arith.constant dense<0.000000e+00> : vector<8x64xf32>
    %132 = tpu.matmul %130, %131, %cst_121 {dimension_numbers = #tpu.dot_dimension_numbers<[1], [0], [0], [1], [0, 0, 1, 1], [], []>} : vector<8x8xf32>, vector<8x64xf32>, vector<8x64xf32> -> vector<8x64xf32>
    %133 = arith.addf %128, %132 : vector<8x64xf32>
    %c5_122 = arith.constant 5 : index
    %c0_123 = arith.constant 0 : index
    %c0_124 = arith.constant 0 : index
    %134 = vector.load %arg5[%c5_122, %c0_123, %c0_124] : memref<9x8x8xf32, #tpu.memory_space<vmem>>, vector<1x8x8xf32>
    %135 = vector.shape_cast %134 : vector<1x8x8xf32> to vector<8x8xf32>
    %c0_125 = arith.constant 0 : index
    %c10 = arith.constant 10 : index
    %136 = vector.load %arg13[%c0_125, %c10] : memref<8x82xf32, #tpu.memory_space<vmem>>, vector<8x64xf32>
    %cst_126 = arith.constant dense<0.000000e+00> : vector<8x64xf32>
    %137 = tpu.matmul %135, %136, %cst_126 {dimension_numbers = #tpu.dot_dimension_numbers<[1], [0], [0], [1], [0, 0, 1, 1], [], []>} : vector<8x8xf32>, vector<8x64xf32>, vector<8x64xf32> -> vector<8x64xf32>
    %cst_127 = arith.constant 0.000000e+00 : f32
    %138 = vector.shape_cast %6 : vector<1x64xi1> to vector<1x64xi1>
    %139 = vector.broadcast %138 : vector<1x64xi1> to vector<8x64xi1>
    %140 = vector.broadcast %cst_127 : f32 to vector<8x64xf32>
    %141 = arith.select %139, %137, %140 : vector<8x64xi1>, vector<8x64xf32>
    %142 = arith.addf %133, %141 : vector<8x64xf32>
    %c6_128 = arith.constant 6 : index
    %c0_129 = arith.constant 0 : index
    %c0_130 = arith.constant 0 : index
    %143 = vector.load %arg5[%c6_128, %c0_129, %c0_130] : memref<9x8x8xf32, #tpu.memory_space<vmem>>, vector<1x8x8xf32>
    %144 = vector.shape_cast %143 : vector<1x8x8xf32> to vector<8x8xf32>
    %c0_131 = arith.constant 0 : index
    %c16 = arith.constant 16 : index
    %145 = vector.load %arg13[%c0_131, %c16] : memref<8x82xf32, #tpu.memory_space<vmem>>, vector<8x64xf32>
    %cst_132 = arith.constant dense<0.000000e+00> : vector<8x64xf32>
    %146 = tpu.matmul %144, %145, %cst_132 {dimension_numbers = #tpu.dot_dimension_numbers<[1], [0], [0], [1], [0, 0, 1, 1], [], []>} : vector<8x8xf32>, vector<8x64xf32>, vector<8x64xf32> -> vector<8x64xf32>
    %cst_133 = arith.constant 0.000000e+00 : f32
    %147 = vector.shape_cast %4 : vector<1x64xi1> to vector<1x64xi1>
    %148 = vector.broadcast %147 : vector<1x64xi1> to vector<8x64xi1>
    %149 = vector.broadcast %cst_133 : f32 to vector<8x64xf32>
    %150 = arith.select %148, %146, %149 : vector<8x64xi1>, vector<8x64xf32>
    %151 = arith.addf %142, %150 : vector<8x64xf32>
    %c7_134 = arith.constant 7 : index
    %c0_135 = arith.constant 0 : index
    %c0_136 = arith.constant 0 : index
    %152 = vector.load %arg5[%c7_134, %c0_135, %c0_136] : memref<9x8x8xf32, #tpu.memory_space<vmem>>, vector<1x8x8xf32>
    %153 = vector.shape_cast %152 : vector<1x8x8xf32> to vector<8x8xf32>
    %c0_137 = arith.constant 0 : index
    %c17 = arith.constant 17 : index
    %154 = vector.load %arg13[%c0_137, %c17] : memref<8x82xf32, #tpu.memory_space<vmem>>, vector<8x64xf32>
    %cst_138 = arith.constant dense<0.000000e+00> : vector<8x64xf32>
    %155 = tpu.matmul %153, %154, %cst_138 {dimension_numbers = #tpu.dot_dimension_numbers<[1], [0], [0], [1], [0, 0, 1, 1], [], []>} : vector<8x8xf32>, vector<8x64xf32>, vector<8x64xf32> -> vector<8x64xf32>
    %156 = arith.addf %151, %155 : vector<8x64xf32>
    %c8_139 = arith.constant 8 : index
    %c0_140 = arith.constant 0 : index
    %c0_141 = arith.constant 0 : index
    %157 = vector.load %arg5[%c8_139, %c0_140, %c0_141] : memref<9x8x8xf32, #tpu.memory_space<vmem>>, vector<1x8x8xf32>
    %158 = vector.shape_cast %157 : vector<1x8x8xf32> to vector<8x8xf32>
    %c0_142 = arith.constant 0 : index
    %c18 = arith.constant 18 : index
    %159 = vector.load %arg13[%c0_142, %c18] : memref<8x82xf32, #tpu.memory_space<vmem>>, vector<8x64xf32>
    %cst_143 = arith.constant dense<0.000000e+00> : vector<8x64xf32>
    %160 = tpu.matmul %158, %159, %cst_143 {dimension_numbers = #tpu.dot_dimension_numbers<[1], [0], [0], [1], [0, 0, 1, 1], [], []>} : vector<8x8xf32>, vector<8x64xf32>, vector<8x64xf32> -> vector<8x64xf32>
    %cst_144 = arith.constant 0.000000e+00 : f32
    %161 = vector.shape_cast %6 : vector<1x64xi1> to vector<1x64xi1>
    %162 = vector.broadcast %161 : vector<1x64xi1> to vector<8x64xi1>
    %163 = vector.broadcast %cst_144 : f32 to vector<8x64xf32>
    %164 = arith.select %162, %160, %163 : vector<8x64xi1>, vector<8x64xf32>
    %165 = arith.addf %156, %164 : vector<8x64xf32>
    %166 = vector.broadcast %17 : vector<8x1xf32> to vector<8x64xf32>
    %167 = arith.mulf %165, %166 : vector<8x64xf32>
    %168 = vector.broadcast %18 : vector<8x1xf32> to vector<8x64xf32>
    %169 = arith.addf %167, %168 : vector<8x64xf32>
    %c0_145 = arith.constant 0 : index
    %c0_146 = arith.constant 0 : index
    %c0_147 = arith.constant 0 : index
    %c0_148 = arith.constant 0 : index
    %170 = vector.load %arg1[%c0_145, %c0_146, %c0_147, %c0_148] : memref<1x4x4x64xf32, #tpu.memory_space<vmem>>, vector<1x1x4x64xf32>
    %171 = vector.shape_cast %170 : vector<1x1x4x64xf32> to vector<4x64xf32>
    %c0_149 = arith.constant 0 : index
    %c0_150 = arith.constant 0 : index
    %172 = vector.load %arg8[%c0_149, %c0_150] : memref<8x4xf32, #tpu.memory_space<vmem>>, vector<8x4xf32>
    %cst_151 = arith.constant dense<0.000000e+00> : vector<8x64xf32>
    %173 = tpu.matmul %172, %171, %cst_151 {dimension_numbers = #tpu.dot_dimension_numbers<[1], [0], [0], [1], [0, 0, 1, 1], [], []>} : vector<8x4xf32>, vector<4x64xf32>, vector<8x64xf32> -> vector<8x64xf32>
    %c0_152 = arith.constant 0 : index
    %c0_153 = arith.constant 0 : index
    %174 = vector.load %arg9[%c0_152, %c0_153] : memref<8x1xf32, #tpu.memory_space<vmem>>, vector<8x1xf32>
    %175 = vector.broadcast %174 : vector<8x1xf32> to vector<8x64xf32>
    %176 = arith.mulf %173, %175 : vector<8x64xf32>
    %c0_154 = arith.constant 0 : index
    %c0_155 = arith.constant 0 : index
    %177 = vector.load %arg10[%c0_154, %c0_155] : memref<8x1xf32, #tpu.memory_space<vmem>>, vector<8x1xf32>
    %178 = vector.broadcast %177 : vector<8x1xf32> to vector<8x64xf32>
    %179 = arith.addf %176, %178 : vector<8x64xf32>
    %180 = arith.addf %169, %179 : vector<8x64xf32>
    %cst_156 = arith.constant 0.000000e+00 : f32
    %181 = vector.broadcast %cst_156 : f32 to vector<8x64xf32>
    %182 = arith.maximumf %180, %181 : vector<8x64xf32>
    %c0_157 = arith.constant 0 : index
    %c0_158 = arith.constant 0 : index
    %c0_159 = arith.constant 0 : index
    %183 = vector.load %arg11[%c0_157, %c0_158, %c0_159] : memref<1x8x64xf32, #tpu.memory_space<vmem>>, vector<1x8x64xf32>
    %184 = vector.shape_cast %183 : vector<1x8x64xf32> to vector<8x64xf32>
    %185 = vector.shape_cast %182 : vector<8x64xf32> to vector<1x8x64xf32>
    tpu.vector_store %arg11[%c0_157, %c0_158, %c0_159], %185 {strides = array<i32>} : memref<1x8x64xf32, #tpu.memory_space<vmem>>, vector<1x8x64xf32>,
    return
  }
  func.func @transform_0(%arg0: i32) -> (i32, i32, i32, i32) {
    %c0_i32 = arith.constant 0 : i32
    %c0_i32_0 = arith.constant 0 : i32
    %c0_i32_1 = arith.constant 0 : i32
    %c0_i32_2 = arith.constant 0 : i32
    return %arg0, %c0_i32, %c0_i32_0, %c0_i32_1 : i32, i32, i32, i32
  }
  func.func @transform_1(%arg0: i32) -> (i32, i32, i32) {
    %c0_i32 = arith.constant 0 : i32
    %c0_i32_0 = arith.constant 0 : i32
    %c0_i32_1 = arith.constant 0 : i32
    %c0_i32_2 = arith.constant 0 : i32
    return %c0_i32, %c0_i32_0, %c0_i32_1 : i32, i32, i32
  }
  func.func @transform_2(%arg0: i32) -> (i32, i32) {
    %c0_i32 = arith.constant 0 : i32
    %c0_i32_0 = arith.constant 0 : i32
    %c0_i32_1 = arith.constant 0 : i32
    return %c0_i32, %c0_i32_0 : i32, i32
  }
  func.func @transform_3(%arg0: i32) -> (i32, i32) {
    %c0_i32 = arith.constant 0 : i32
    %c0_i32_0 = arith.constant 0 : i32
    %c0_i32_1 = arith.constant 0 : i32
    return %c0_i32, %c0_i32_0 : i32, i32
  }
  func.func @transform_4(%arg0: i32) -> (i32, i32, i32) {
    %c0_i32 = arith.constant 0 : i32
    %c0_i32_0 = arith.constant 0 : i32
    %c0_i32_1 = arith.constant 0 : i32
    %c0_i32_2 = arith.constant 0 : i32
    return %c0_i32, %c0_i32_0, %c0_i32_1 : i32, i32, i32
  }
  func.func @transform_5(%arg0: i32) -> (i32, i32) {
    %c0_i32 = arith.constant 0 : i32
    %c0_i32_0 = arith.constant 0 : i32
    %c0_i32_1 = arith.constant 0 : i32
    return %c0_i32, %c0_i32_0 : i32, i32
  }
  func.func @transform_6(%arg0: i32) -> (i32, i32) {
    %c0_i32 = arith.constant 0 : i32
    %c0_i32_0 = arith.constant 0 : i32
    %c0_i32_1 = arith.constant 0 : i32
    return %c0_i32, %c0_i32_0 : i32, i32
  }
  func.func @transform_7(%arg0: i32) -> (i32, i32) {
    %c0_i32 = arith.constant 0 : i32
    %c0_i32_0 = arith.constant 0 : i32
    %c0_i32_1 = arith.constant 0 : i32
    return %c0_i32, %c0_i32_0 : i32, i32
  }
  func.func @transform_8(%arg0: i32) -> (i32, i32) {
    %c0_i32 = arith.constant 0 : i32
    %c0_i32_0 = arith.constant 0 : i32
    %c0_i32_1 = arith.constant 0 : i32
    return %c0_i32, %c0_i32_0 : i32, i32
  }
  func.func @transform_9(%arg0: i32) -> (i32, i32) {
    %c0_i32 = arith.constant 0 : i32
    %c0_i32_0 = arith.constant 0 : i32
    %c0_i32_1 = arith.constant 0 : i32
    return %c0_i32, %c0_i32_0 : i32, i32
  }
  func.func @transform_10(%arg0: i32) -> (i32, i32, i32) {
    %c0_i32 = arith.constant 0 : i32
    %c0_i32_0 = arith.constant 0 : i32
    %c0_i32_1 = arith.constant 0 : i32
    return %arg0, %c0_i32, %c0_i32_0 : i32, i32, i32
  }
}

</mosaic_0001>

<llo_original>
// kernel: tpu_custom_call.1
$region0: #{tpu_custom_call.1}
  #allocation0 [shape = 'u32[]', space=smem, size = 0x4, offset = 0x4, fixed_abs, tag = 'smem constant byte address 0x4 - core index']
  #allocation1 [shape = 'u32[144,128]{1,0:T(1,128)}', space=vmem, size = 0x12000, scoped, tag = 'internal scratch']
  #allocation2 [shape = 'f32[4,4,82]{2,1,0:T(4,128)}', space=vmem, size = 0x2000, scoped, tag = 'scratch operand']
  #allocation3 [shape = 'f32[8,82]{1,0:T(8,128)}', space=vmem, size = 0x1000, scoped, tag = 'scratch operand']
  %s0 = inlined_call_operand.vmem [shape: f32[2,4,4,64], index: 0, kind: input, shape index: {}]
  %s1 = inlined_call_operand.vmem [shape: f32[9,8,4], index: 1, kind: input, shape index: {}]
  %s2 = inlined_call_operand.vmem [shape: f32[8,1], index: 2, kind: input, shape index: {}]
  %s3 = inlined_call_operand.vmem [shape: f32[8,1], index: 3, kind: input, shape index: {}]
  %s4 = inlined_call_operand.vmem [shape: f32[9,8,8], index: 4, kind: input, shape index: {}]
  %s5 = inlined_call_operand.vmem [shape: f32[8,1], index: 5, kind: input, shape index: {}]
  %s6 = inlined_call_operand.vmem [shape: f32[8,1], index: 6, kind: input, shape index: {}]
  %s7 = inlined_call_operand.vmem [shape: f32[8,4], index: 7, kind: input, shape index: {}]
  %s8 = inlined_call_operand.vmem [shape: f32[8,1], index: 8, kind: input, shape index: {}]
  %s9 = inlined_call_operand.vmem [shape: f32[8,1], index: 9, kind: input, shape index: {}]
  %s10 = inlined_call_operand.hbm [shape: f32[2,8,64], index: 10, kind: output, shape index: {}]
  %s11 = sld [smem:[#allocation0]]
  $region73: #{tpu_custom_call.1} parent=0
    _
  %s13 = ssub.s32 1, %s11
  %s14 = scalar_select 0, %s13, %s11
  $region1: #{tpu_custom_call.1} parent=0
    #allocation4 [shape = 'u8[8192]{0}', space=vmem, size = 0x2000, scoped, tag = 'output window, operand 0']
    #allocation5 [shape = 's32[2]{0}', space=sflag, size = 0x8, scoped, tag = 'scoped memory for tpu_custom_call.1']
    %15 = vsyncpa [#allocation5], 0
    %s16 = scalar_lea.sflag [#allocation5], 1
    %17 = vsyncpa %s16, 0
    loop: start=0, step=1, limit=4
    $region2: #{tpu_custom_call.1} parent=1 // loop_pre_header
      _
    $region3: #{tpu_custom_call.1} parent=1 // loop_header
      %s19 = sphi 0, %s23
      %p20 = scmp.ge.s32.totalorder %s19, 4
      %s29 = sphi 0, %s31
      %s32 = sphi 0, %s29
      %s33 = sphi 0, %s32
      %s49 = sphi 0, %s33
      %s53 = sphi 0, %s53
      %s55 = sphi 0, %s53
      %s56 = sphi 0, %s55
      %s70 = sphi 0, %s56
      %s74 = sphi 0, %s74
      %s76 = sphi 0, %s74
      %s77 = sphi 0, %s76
      %s91 = sphi 0, %s77
      %s95 = sphi 0, %s95
      %s97 = sphi 0, %s95
      %s98 = sphi 0, %s97
      %s112 = sphi 0, %s98
      %s116 = sphi 0, %s116
      %s118 = sphi 0, %s116
      %s119 = sphi 0, %s118
      %s133 = sphi 0, %s119
      %s137 = sphi 0, %s137
      %s139 = sphi 0, %s137
      %s140 = sphi 0, %s139
      %s154 = sphi 0, %s140
      %s158 = sphi 0, %s158
      %s160 = sphi 0, %s158
      %s161 = sphi 0, %s160
      %s175 = sphi 0, %s161
      %s179 = sphi 0, %s179
      %s181 = sphi 0, %s179
      %s182 = sphi 0, %s181
      %s196 = sphi 0, %s182
      %s200 = sphi 0, %s200
      %s202 = sphi 0, %s200
      %s203 = sphi 0, %s202
      %s217 = sphi 0, %s203
      %s221 = sphi 0, %s221
      %s223 = sphi 0, %s221
      %s224 = sphi 0, %s223
      %s238 = sphi 0, %s224
      %s244 = sphi 0, %s246
      %s247 = sphi 0, %s244
      %s248 = sphi 0, %s247
      %s264 = sphi 0, %s248
    $region4: #{tpu_custom_call.1} parent=1 // loop_header_branch
      %22 = sbr.rel (%p20) target = $region8
    $region5: #{tpu_custom_call.1} parent=1 // loop_body
      %s24 = ssub.s32 %s19, 1
      %s25 = ssub.s32 %s19, 2
      %s26 = sadd.s32 %s19, 1
      %s27 = ssub.s32 %s19, %s26
      %p28 = scmp.eq.s32.totalorder %s27, 0
      %s30 = sadd.s32 %s29, 1
      %s31 = scalar_select %p28, %s29, %s30
      %p34 = pneg %p28
      %p35 = scmp.eq.s32.totalorder %s19, 1
      %p36 = por %p34, %p35
      %p37 = scmp.ne.s32.totalorder %s29, %s32
      %p38 = scmp.eq.s32.totalorder %s19, 0
      %p39 = por %p37, %p38
      %p40 = scmp.ne.s32.totalorder %s29, %s32
      %p41 = scmp.eq.s32.totalorder %s24, 1
      %p42 = por %p40, %p41
      %p43 = scmp.ne.s32.totalorder %s32, %s33
      %p44 = scmp.eq.s32.totalorder %s24, 0
      %p45 = por %p43, %p44
      %p46 = scmp.ne.s32.totalorder %s32, %s33
      %p47 = scmp.eq.s32.totalorder %s25, 1
      %p48 = por %p46, %p47
      %p50 = scmp.ne.s32.totalorder %s33, %s49
      %p51 = scmp.eq.s32.totalorder %s25, 0
      %p52 = por %p50, %p51
      %s54 = sadd.s32 %s53, 1
      %p57 = scmp.eq.s32.totalorder %s19, 1
      %p58 = scmp.ne.s32.totalorder %s53, %s55
      %p59 = scmp.eq.s32.totalorder %s19, 0
      %p60 = por %p58, %p59
      %p61 = scmp.ne.s32.totalorder %s53, %s55
      %p62 = scmp.eq.s32.totalorder %s24, 1
      %p63 = por %p61, %p62
      %p64 = scmp.ne.s32.totalorder %s55, %s56
      %p65 = scmp.eq.s32.totalorder %s24, 0
      %p66 = por %p64, %p65
      %p67 = scmp.ne.s32.totalorder %s55, %s56
      %p68 = scmp.eq.s32.totalorder %s25, 1
      %p69 = por %p67, %p68
      %p71 = scmp.ne.s32.totalorder %s56, %s70
      %p72 = scmp.eq.s32.totalorder %s25, 0
      %p73 = por %p71, %p72
      %s75 = sadd.s32 %s74, 1
      %p78 = scmp.eq.s32.totalorder %s19, 1
      %p79 = scmp.ne.s32.totalorder %s74, %s76
      %p80 = scmp.eq.s32.totalorder %s19, 0
      %p81 = por %p79, %p80
      %p82 = scmp.ne.s32.totalorder %s74, %s76
      %p83 = scmp.eq.s32.totalorder %s24, 1
      %p84 = por %p82, %p83
      %p85 = scmp.ne.s32.totalorder %s76, %s77
      %p86 = scmp.eq.s32.totalorder %s24, 0
      %p87 = por %p85, %p86
      %p88 = scmp.ne.s32.totalorder %s76, %s77
      %p89 = scmp.eq.s32.totalorder %s25, 1
      %p90 = por %p88, %p89
      %p92 = scmp.ne.s32.totalorder %s77, %s91
      %p93 = scmp.eq.s32.totalorder %s25, 0
      %p94 = por %p92, %p93
      %s96 = sadd.s32 %s95, 1
      %p99 = scmp.eq.s32.totalorder %s19, 1
      %p100 = scmp.ne.s32.totalorder %s95, %s97
      %p101 = scmp.eq.s32.totalorder %s19, 0
      %p102 = por %p100, %p101
      %p103 = scmp.ne.s32.totalorder %s95, %s97
      %p104 = scmp.eq.s32.totalorder %s24, 1
      %p105 = por %p103, %p104
      %p106 = scmp.ne.s32.totalorder %s97, %s98
      %p107 = scmp.eq.s32.totalorder %s24, 0
      %p108 = por %p106, %p107
      %p109 = scmp.ne.s32.totalorder %s97, %s98
      %p110 = scmp.eq.s32.totalorder %s25, 1
      %p111 = por %p109, %p110
      %p113 = scmp.ne.s32.totalorder %s98, %s112
      %p114 = scmp.eq.s32.totalorder %s25, 0
      %p115 = por %p113, %p114
      %s117 = sadd.s32 %s116, 1
      %p120 = scmp.eq.s32.totalorder %s19, 1
      %p121 = scmp.ne.s32.totalorder %s116, %s118
      %p122 = scmp.eq.s32.totalorder %s19, 0
      %p123 = por %p121, %p122
      %p124 = scmp.ne.s32.totalorder %s116, %s118
      %p125 = scmp.eq.s32.totalorder %s24, 1
      %p126 = por %p124, %p125
      %p127 = scmp.ne.s32.totalorder %s118, %s119
      %p128 = scmp.eq.s32.totalorder %s24, 0
      %p129 = por %p127, %p128
      %p130 = scmp.ne.s32.totalorder %s118, %s119
      %p131 = scmp.eq.s32.totalorder %s25, 1
      %p132 = por %p130, %p131
      %p134 = scmp.ne.s32.totalorder %s119, %s133
      %p135 = scmp.eq.s32.totalorder %s25, 0
      %p136 = por %p134, %p135
      %s138 = sadd.s32 %s137, 1
      %p141 = scmp.eq.s32.totalorder %s19, 1
      %p142 = scmp.ne.s32.totalorder %s137, %s139
      %p143 = scmp.eq.s32.totalorder %s19, 0
      %p144 = por %p142, %p143
      %p145 = scmp.ne.s32.totalorder %s137, %s139
      %p146 = scmp.eq.s32.totalorder %s24, 1
      %p147 = por %p145, %p146
      %p148 = scmp.ne.s32.totalorder %s139, %s140
      %p149 = scmp.eq.s32.totalorder %s24, 0
      %p150 = por %p148, %p149
      %p151 = scmp.ne.s32.totalorder %s139, %s140
      %p152 = scmp.eq.s32.totalorder %s25, 1
      %p153 = por %p151, %p152
      %p155 = scmp.ne.s32.totalorder %s140, %s154
      %p156 = scmp.eq.s32.totalorder %s25, 0
      %p157 = por %p155, %p156
      %s159 = sadd.s32 %s158, 1
      %p162 = scmp.eq.s32.totalorder %s19, 1
      %p163 = scmp.ne.s32.totalorder %s158, %s160
      %p164 = scmp.eq.s32.totalorder %s19, 0
      %p165 = por %p163, %p164
      %p166 = scmp.ne.s32.totalorder %s158, %s160
      %p167 = scmp.eq.s32.totalorder %s24, 1
      %p168 = por %p166, %p167
      %p169 = scmp.ne.s32.totalorder %s160, %s161
      %p170 = scmp.eq.s32.totalorder %s24, 0
      %p171 = por %p169, %p170
      %p172 = scmp.ne.s32.totalorder %s160, %s161
      %p173 = scmp.eq.s32.totalorder %s25, 1
      %p174 = por %p172, %p173
      %p176 = scmp.ne.s32.totalorder %s161, %s175
      %p177 = scmp.eq.s32.totalorder %s25, 0
      %p178 = por %p176, %p177
      %s180 = sadd.s32 %s179, 1
      %p183 = scmp.eq.s32.totalorder %s19, 1
      %p184 = scmp.ne.s32.totalorder %s179, %s181
      %p185 = scmp.eq.s32.totalorder %s19, 0
      %p186 = por %p184, %p185
      %p187 = scmp.ne.s32.totalorder %s179, %s181
      %p188 = scmp.eq.s32.totalorder %s24, 1
      %p189 = por %p187, %p188
      %p190 = scmp.ne.s32.totalorder %s181, %s182
      %p191 = scmp.eq.s32.totalorder %s24, 0
      %p192 = por %p190, %p191
      %p193 = scmp.ne.s32.totalorder %s181, %s182
      %p194 = scmp.eq.s32.totalorder %s25, 1
      %p195 = por %p193, %p194
      %p197 = scmp.ne.s32.totalorder %s182, %s196
      %p198 = scmp.eq.s32.totalorder %s25, 0
      %p199 = por %p197, %p198
      %s201 = sadd.s32 %s200, 1
      %p204 = scmp.eq.s32.totalorder %s19, 1
      %p205 = scmp.ne.s32.totalorder %s200, %s202
      %p206 = scmp.eq.s32.totalorder %s19, 0
      %p207 = por %p205, %p206
      %p208 = scmp.ne.s32.totalorder %s200, %s202
      %p209 = scmp.eq.s32.totalorder %s24, 1
      %p210 = por %p208, %p209
      %p211 = scmp.ne.s32.totalorder %s202, %s203
      %p212 = scmp.eq.s32.totalorder %s24, 0
      %p213 = por %p211, %p212
      %p214 = scmp.ne.s32.totalorder %s202, %s203
      %p215 = scmp.eq.s32.totalorder %s25, 1
      %p216 = por %p214, %p215
      %p218 = scmp.ne.s32.totalorder %s203, %s217
      %p219 = scmp.eq.s32.totalorder %s25, 0
      %p220 = por %p218, %p219
      %s222 = sadd.s32 %s221, 1
      %p225 = scmp.eq.s32.totalorder %s19, 1
      %p226 = scmp.ne.s32.totalorder %s221, %s223
      %p227 = scmp.eq.s32.totalorder %s19, 0
      %p228 = por %p226, %p227
      %p229 = scmp.ne.s32.totalorder %s221, %s223
      %p230 = scmp.eq.s32.totalorder %s24, 1
      %p231 = por %p229, %p230
      %p232 = scmp.ne.s32.totalorder %s223, %s224
      %p233 = scmp.eq.s32.totalorder %s24, 0
      %p234 = por %p232, %p233
      %p235 = scmp.ne.s32.totalorder %s223, %s224
      %p236 = scmp.eq.s32.totalorder %s25, 1
      %p237 = por %p235, %p236
      %p239 = scmp.ne.s32.totalorder %s224, %s238
      %p240 = scmp.eq.s32.totalorder %s25, 0
      %p241 = por %p239, %p240
      %s242 = ssub.s32 %s19, %s26
      %p243 = scmp.eq.s32.totalorder %s242, 0
      %s245 = sadd.s32 %s244, 1
      %s246 = scalar_select %p243, %s244, %s245
      %p249 = pneg %p243
      %p250 = scmp.eq.s32.totalorder %s19, 1
      %p251 = por %p249, %p250
      %p252 = scmp.ne.s32.totalorder %s244, %s247
      %p253 = scmp.eq.s32.totalorder %s19, 0
      %p254 = por %p252, %p253
      %p255 = scmp.ne.s32.totalorder %s244, %s247
      %p256 = scmp.eq.s32.totalorder %s24, 1
      %p257 = por %p255, %p256
      %p258 = scmp.ne.s32.totalorder %s247, %s248
      %p259 = scmp.eq.s32.totalorder %s24, 0
      %p260 = por %p258, %p259
      %p261 = scmp.ne.s32.totalorder %s247, %s248
      %p262 = scmp.eq.s32.totalorder %s25, 1
      %p263 = por %p261, %p262
      %p265 = scmp.ne.s32.totalorder %s248, %s264
      %p266 = scmp.eq.s32.totalorder %s25, 0
      %p267 = por %p265, %p266
      %p268 = scmp.le.s32.totalorder 1, %s19
      %p269 = scmp.lt.s32.totalorder %s19, 3
      %p270 = pnand %p268, %p269
      %p271 = pneg %p270
      // Predicated region
      $region9: #{tpu_custom_call.1} parent=5 // pred_check
        _
      $region10: #{tpu_custom_call.1} parent=5 // pred_check_branch
        %273 = sbr.rel (%p270) target = $region12
      $region11: #{tpu_custom_call.1} parent=5 // pred_region
        %s274 = ssub.s32 %s19, 1
        // Predicated region
        $region13: #{tpu_custom_call.1} parent=11 // pred_check
          %p275 = pneg %p66
        $region14: #{tpu_custom_call.1} parent=11 // pred_check_branch
          %277 = sbr.rel (%p275) target = $region16
        $region15: #{tpu_custom_call.1} parent=11 // pred_region
          _
        $region16: #{tpu_custom_call.1} parent=11 // pred_fallthru
          _
        // Predicated region
        $region17: #{tpu_custom_call.1} parent=11 // pred_check
          %p278 = pneg %p87
        $region18: #{tpu_custom_call.1} parent=11 // pred_check_branch
          %280 = sbr.rel (%p278) target = $region20
        $region19: #{tpu_custom_call.1} parent=11 // pred_region
          _
        $region20: #{tpu_custom_call.1} parent=11 // pred_fallthru
          _
        // Predicated region
        $region21: #{tpu_custom_call.1} parent=11 // pred_check
          %p281 = pneg %p108
        $region22: #{tpu_custom_call.1} parent=11 // pred_check_branch
          %283 = sbr.rel (%p281) target = $region24
        $region23: #{tpu_custom_call.1} parent=11 // pred_region
          _
        $region24: #{tpu_custom_call.1} parent=11 // pred_fallthru
          _
        // Predicated region
        $region25: #{tpu_custom_call.1} parent=11 // pred_check
          %p284 = pneg %p129
        $region26: #{tpu_custom_call.1} parent=11 // pred_check_branch
          %286 = sbr.rel (%p284) target = $region28
        $region27: #{tpu_custom_call.1} parent=11 // pred_region
          _
        $region28: #{tpu_custom_call.1} parent=11 // pred_fallthru
          _
        // Predicated region
        $region29: #{tpu_custom_call.1} parent=11 // pred_check
          %p287 = pneg %p150
        $region30: #{tpu_custom_call.1} parent=11 // pred_check_branch
          %289 = sbr.rel (%p287) target = $region32
        $region31: #{tpu_custom_call.1} parent=11 // pred_region
          _
        $region32: #{tpu_custom_call.1} parent=11 // pred_fallthru
          _
        // Predicated region
        $region33: #{tpu_custom_call.1} parent=11 // pred_check
          %p290 = pneg %p171
        $region34: #{tpu_custom_call.1} parent=11 // pred_check_branch
          %292 = sbr.rel (%p290) target = $region36
        $region35: #{tpu_custom_call.1} parent=11 // pred_region
          _
        $region36: #{tpu_custom_call.1} parent=11 // pred_fallthru
          _
        // Predicated region
        $region37: #{tpu_custom_call.1} parent=11 // pred_check
          %p293 = pneg %p192
        $region38: #{tpu_custom_call.1} parent=11 // pred_check_branch
          %295 = sbr.rel (%p293) target = $region40
        $region39: #{tpu_custom_call.1} parent=11 // pred_region
          _
        $region40: #{tpu_custom_call.1} parent=11 // pred_fallthru
          _
        // Predicated region
        $region41: #{tpu_custom_call.1} parent=11 // pred_check
          %p296 = pneg %p213
        $region42: #{tpu_custom_call.1} parent=11 // pred_check_branch
          %298 = sbr.rel (%p296) target = $region44
        $region43: #{tpu_custom_call.1} parent=11 // pred_region
          _
        $region44: #{tpu_custom_call.1} parent=11 // pred_fallthru
          _
        // Predicated region
        $region45: #{tpu_custom_call.1} parent=11 // pred_check
          %p299 = pneg %p234
        $region46: #{tpu_custom_call.1} parent=11 // pred_check_branch
          %301 = sbr.rel (%p299) target = $region48
        $region47: #{tpu_custom_call.1} parent=11 // pred_region
          _
        $region48: #{tpu_custom_call.1} parent=11 // pred_fallthru
          _
      $region12: #{tpu_custom_call.1} parent=5 // pred_fallthru
        _
      %p302 = scmp.lt.s32.totalorder %s19, 2
      // Predicated region
      $region49: #{tpu_custom_call.1} parent=5 // pred_check
        %p303 = pneg %p302
      $region50: #{tpu_custom_call.1} parent=5 // pred_check_branch
        %305 = sbr.rel (%p303) target = $region52
      $region51: #{tpu_custom_call.1} parent=5 // pred_region
        // Predicated region
        $region53: #{tpu_custom_call.1} parent=51 // pred_check
          %p306 = pneg %p39
        $region54: #{tpu_custom_call.1} parent=51 // pred_check_branch
          %308 = sbr.rel (%p306) target = $region56
        $region55: #{tpu_custom_call.1} parent=51 // pred_region
          %p309 = scmp.lt.s32.totalorder %s19, 1
          %s310 = scalar_select %p309, %s19, 1
          %s311 = smul.addr %s310, 4
          %s312 = smul.addr %s311, 4
          %s313 = scalar_lea.vmem %s0, %s312
        $region56: #{tpu_custom_call.1} parent=51 // pred_fallthru
          _
      $region52: #{tpu_custom_call.1} parent=5 // pred_fallthru
        _
      %p314 = scmp.le.s32.totalorder 1, %s19
      %p315 = scmp.lt.s32.totalorder %s19, 3
      %p316 = pnand %p314, %p315
      %p317 = pneg %p316
      // Predicated region
      $region57: #{tpu_custom_call.1} parent=5 // pred_check
        _
      $region58: #{tpu_custom_call.1} parent=5 // pred_check_branch
        %319 = sbr.rel (%p316) target = $region60
      $region59: #{tpu_custom_call.1} parent=5 // pred_region
        %s320 = ssub.s32 %s19, 1
        %p321 = scmp.lt.s32.totalorder %s24, 1
        %s322 = scalar_select %p321, %s24, 1
        %s323 = smul.addr %s322, 4
        %s324 = smul.addr %s323, 4
        %s325 = scalar_lea.vmem %s0, %s324
        %p326 = pneg %p45
        %p327 = pneg %p42
        %p328 = pneg %p66
        %p329 = pneg %p63
        %p330 = pneg %p87
        %p331 = pneg %p84
        %p332 = pneg %p108
        %p333 = pneg %p105
        %p334 = pneg %p129
        %p335 = pneg %p126
        %p336 = pneg %p150
        %p337 = pneg %p147
        %p338 = pneg %p171
        %p339 = pneg %p168
        %p340 = pneg %p192
        %p341 = pneg %p189
        %p342 = pneg %p213
        %p343 = pneg %p210
        %p344 = pneg %p234
        %p345 = pneg %p231
        %p346 = pneg %p260
        %p347 = pneg %p257
        %s348 = sand.u32 %s247, 1
        %s349 = scalar_lea.sflag [#allocation5], %s348
        %s350 = sand.u32 %s247, 1
        %s351 = smul.addr %s350, 8
        %s352 = scalar_lea.vmem [#allocation4], %s351
        %p353 = scmp.lt.s32.totalorder %s24, 1
        %s354 = scalar_select %p353, %s24, 1
        %s355 = smul.addr %s354, 4
        %s356 = smul.addr %s355, 4
        %s357 = scalar_lea.vmem %s0, %s356
        %v358 = vlaneseq
        %v359 = vand.u32 %v358, 127
        %v360 = vand.u32 %v359, 7
        %vm361 = vcmp.ne.s32.totalorder %v360, 0
        %vm362 = vcmp.ne.s32.totalorder %v360, 7
        %vm363 = vcmask 68608
        %364 = vst.msk [vmem:[#allocation2] sm:$0xf] %vm363, 0.0
        %365 = vst.msk [vmem:[#allocation2 + $0x4] sm:$0xf] %vm363, 0.0
        %366 = vst.msk [vmem:[#allocation2 + $0x8] sm:$0xf] %vm363, 0.0
        %367 = vst.msk [vmem:[#allocation2 + $0xc] sm:$0xf] %vm363, 0.0
        %vm368 = vcmask 667208
        %369 = vst.msk [vmem:[#allocation2] sm:$0xf] %vm368, 0.0
        %370 = vst.msk [vmem:[#allocation2 + $0x4] sm:$0xf] %vm368, 0.0
        %371 = vst.msk [vmem:[#allocation2 + $0x8] sm:$0xf] %vm368, 0.0
        %372 = vst.msk [vmem:[#allocation2 + $0xc] sm:$0xf] %vm368, 0.0
        %vm373 = vcmask 72704
        %374 = vst.msk [vmem:[#allocation3] sm:$0xff] %vm373, 0.0
        %vm375 = vcmask 671304
        %376 = vst.msk [vmem:[#allocation3] sm:$0xff] %vm375, 0.0
        %v377 = vld [vmem:[%s2] sm:$0xff]
        %v378 = vld [vmem:[%s3] sm:$0xff]
        %v379 = vld [vmem:[%s5] sm:$0xff]
        %v380 = vld [vmem:[%s6] sm:$0xff]
        %v381 = vld [vmem:[%s357] sm:$0xf]
        %v382 = vld [vmem:[%s357 + $0x4] sm:$0xf]
        %v383 = vld [vmem:[%s357 + $0x8] sm:$0xf]
        %v384 = vld [vmem:[%s357 + $0xc] sm:$0xf]
        %389 = vrot.lane.b32.xlu0 %v381, 9
        %v390 = vpop.permute.xlu0 %389
        %391 = vrot.lane.b32.xlu0 %v382, 9
        %v392 = vpop.permute.xlu0 %391
        %393 = vrot.lane.b32.xlu0 %v383, 9
        %v394 = vpop.permute.xlu0 %393
        %395 = vrot.lane.b32.xlu0 %v384, 9
        %v396 = vpop.permute.xlu0 %395
        %vm401 = vcmask 592968
        %402 = vst.msk [vmem:[#allocation2] sm:$0xf] %vm401, %v390
        %403 = vst.msk [vmem:[#allocation2 + $0x4] sm:$0xf] %vm401, %v392
        %404 = vst.msk [vmem:[#allocation2 + $0x8] sm:$0xf] %vm401, %v394
        %405 = vst.msk [vmem:[#allocation2 + $0xc] sm:$0xf] %vm401, %v396
        %v406 = vld [vmem:[%s1] sm:$0xff]
        %s407 = scalar_lea.vmem [#allocation2], 12
        %v408 = vld [vmem:[%s407] sm:$0xf]
        %vm409 = vcmask 31744
        %v411 = vsel %vm409, %v406, 0
        %vm413 = vcmask 1043456
        %v415 = vsel %vm413, %v408, 0
        %417 = vmatprep.subr.mxu0 0.0
        %418 = vmatpush1.msra.mxu0 %v415
        %419 = vmatprep.subr.mxu0 0.0
        %420 = vmatpush1.msra.mxu0 0.0
        %421 = vmatprep.subr.mxu0 0.0
        %422 = vmatpush1.msra.mxu0 0.0
        %423 = vmatprep.subr.mxu0 0.0
        %424 = vmatpush1.msra.mxu0 0.0
        %425 = vmatprep.subr.mxu0 0.0
        %426 = vmatpush1.msra.mxu0 0.0
        %427 = vmatprep.subr.mxu0 0.0
        %428 = vmatpush1.msra.mxu0 0.0
        %429 = vmatprep.subr.mxu0 0.0
        %430 = vmatpush1.msra.mxu0 0.0
        %431 = vmatprep.subr.mxu0 0.0
        %432 = vmatpush1.msra.mxu0 0.0
        %433 = vmatprep.subr.mxu0 0.0
        %434 = vmatpush1.msra.mxu0 0.0
        %435 = vmatprep.subr.mxu0 0.0
        %436 = vmatpush1.msra.mxu0 0.0
        %437 = vmatprep.subr.mxu0 0.0
        %438 = vmatpush1.msra.mxu0 0.0
        %439 = vmatprep.subr.mxu0 0.0
        %440 = vmatpush1.msra.mxu0 0.0
        %441 = vmatprep.subr.mxu0 0.0
        %442 = vmatpush1.msra.mxu0 0.0
        %443 = vmatprep.subr.mxu0 0.0
        %444 = vmatpush1.msra.mxu0 0.0
        %445 = vmatprep.subr.mxu0 0.0
        %446 = vmatpush1.msra.mxu0 0.0
        %447 = vmatprep.subr.mxu0 0.0
        %448 = vmatpush1.msra.mxu0 0.0
        %449 = vmatprep.subr.mxu0 0.0
        %450 = vmatpush1.msra.mxu0 0.0
        %451 = vmatprep.subr.mxu0 0.0
        %452 = vmatpush1.msra.mxu0 0.0
        %453 = vmatprep.subr.mxu0 0.0
        %454 = vmatpush1.msra.mxu0 0.0
        %455 = vmatprep.subr.mxu0 0.0
        %456 = vmatpush1.msra.mxu0 0.0
        %457 = vmatprep.subr.mxu0 0.0
        %458 = vmatpush1.msra.mxu0 0.0
        %459 = vmatprep.subr.mxu0 0.0
        %460 = vmatpush1.msra.mxu0 0.0
        %461 = vmatprep.subr.mxu0 0.0
        %462 = vmatpush1.msra.mxu0 0.0
        %463 = vmatprep.subr.mxu0 0.0
        %464 = vmatpush1.msra.mxu0 0.0
        %465 = vmatprep.subr.mxu0 0.0
        %466 = vmatpush1.msra.mxu0 0.0
        %467 = vmatprep.subr.mxu0 0.0
        %468 = vmatpush1.msra.mxu0 0.0
        %469 = vmatprep.subr.mxu0 0.0
        %470 = vmatpush1.msra.mxu0 0.0
        %471 = vmatprep.subr.mxu0 0.0
        %472 = vmatpush1.msra.mxu0 0.0
        %473 = vmatprep.subr.mxu0 0.0
        %474 = vmatpush1.msra.mxu0 0.0
        %475 = vmatprep.subr.mxu0 0.0
        %476 = vmatpush1.msra.mxu0 0.0
        %477 = vmatprep.subr.mxu0 0.0
        %478 = vmatpush1.msra.mxu0 0.0
        %479 = vmatprep.subr.mxu0 0.0
        %480 = vmatpush1.msra.mxu0 0.0
        %481 = vmatprep.mubr.f32.mxu0 0.0
        %482 = vmatmul.mubr.f32.gmra.mrb[0].mxu0 %v411
        %v483 = vpop.f32.mrb[0].mxu0
        %v484 = vadd.f32 0.0, %v483
        %v485 = vpop.f32.mrb[0].mxu0
        %486 = vdwg.mxu0
        %v487 = vsel %vm361, 1, 0
        %vm488 = vcmp.eq.s32.totalorder %v487, 1
        %v489 = vsel %vm488, %v484, 0.0
        %v490 = vadd.f32 %v489, 0.0
        %s491 = scalar_lea.vmem %s1, 8
        %v492 = vld [vmem:[%s491] sm:$0xff]
        %s493 = scalar_lea.vmem [#allocation2], 8
        %v494 = vld [vmem:[%s493] sm:$0xf]
        %496 = vrot.lane.b32.xlu0 %v494, 127
        %v497 = vpop.permute.xlu0 %496
        %v499 = vsel %vm409, %v492, 0
        %v501 = vsel %vm413, %v497, 0
        %503 = vmatprep.subr.mxu0 0.0
        %504 = vmatpush1.msra.mxu0 %v501
        %505 = vmatprep.subr.mxu0 0.0
        %506 = vmatpush1.msra.mxu0 0.0
        %507 = vmatprep.subr.mxu0 0.0
        %508 = vmatpush1.msra.mxu0 0.0
        %509 = vmatprep.subr.mxu0 0.0
        %510 = vmatpush1.msra.mxu0 0.0
        %511 = vmatprep.subr.mxu0 0.0
        %512 = vmatpush1.msra.mxu0 0.0
        %513 = vmatprep.subr.mxu0 0.0
        %514 = vmatpush1.msra.mxu0 0.0
        %515 = vmatprep.subr.mxu0 0.0
        %516 = vmatpush1.msra.mxu0 0.0
        %517 = vmatprep.subr.mxu0 0.0
        %518 = vmatpush1.msra.mxu0 0.0
        %519 = vmatprep.subr.mxu0 0.0
        %520 = vmatpush1.msra.mxu0 0.0
        %521 = vmatprep.subr.mxu0 0.0
        %522 = vmatpush1.msra.mxu0 0.0
        %523 = vmatprep.subr.mxu0 0.0
        %524 = vmatpush1.msra.mxu0 0.0
        %525 = vmatprep.subr.mxu0 0.0
        %526 = vmatpush1.msra.mxu0 0.0
        %527 = vmatprep.subr.mxu0 0.0
        %528 = vmatpush1.msra.mxu0 0.0
        %529 = vmatprep.subr.mxu0 0.0
        %530 = vmatpush1.msra.mxu0 0.0
        %531 = vmatprep.subr.mxu0 0.0
        %532 = vmatpush1.msra.mxu0 0.0
        %533 = vmatprep.subr.mxu0 0.0
        %534 = vmatpush1.msra.mxu0 0.0
        %535 = vmatprep.subr.mxu0 0.0
        %536 = vmatpush1.msra.mxu0 0.0
        %537 = vmatprep.subr.mxu0 0.0
        %538 = vmatpush1.msra.mxu0 0.0
        %539 = vmatprep.subr.mxu0 0.0
        %540 = vmatpush1.msra.mxu0 0.0
        %541 = vmatprep.subr.mxu0 0.0
        %542 = vmatpush1.msra.mxu0 0.0
        %543 = vmatprep.subr.mxu0 0.0
        %544 = vmatpush1.msra.mxu0 0.0
        %545 = vmatprep.subr.mxu0 0.0
        %546 = vmatpush1.msra.mxu0 0.0
        %547 = vmatprep.subr.mxu0 0.0
        %548 = vmatpush1.msra.mxu0 0.0
        %549 = vmatprep.subr.mxu0 0.0
        %550 = vmatpush1.msra.mxu0 0.0
        %551 = vmatprep.subr.mxu0 0.0
        %552 = vmatpush1.msra.mxu0 0.0
        %553 = vmatprep.subr.mxu0 0.0
        %554 = vmatpush1.msra.mxu0 0.0
        %555 = vmatprep.subr.mxu0 0.0
        %556 = vmatpush1.msra.mxu0 0.0
        %557 = vmatprep.subr.mxu0 0.0
        %558 = vmatpush1.msra.mxu0 0.0
        %559 = vmatprep.subr.mxu0 0.0
        %560 = vmatpush1.msra.mxu0 0.0
        %561 = vmatprep.subr.mxu0 0.0
        %562 = vmatpush1.msra.mxu0 0.0
        %563 = vmatprep.subr.mxu0 0.0
        %564 = vmatpush1.msra.mxu0 0.0
        %565 = vmatprep.subr.mxu0 0.0
        %566 = vmatpush1.msra.mxu0 0.0
        %567 = vmatprep.mubr.f32.mxu0 0.0
        %568 = vmatmul.mubr.f32.gmra.mrb[0].mxu0 %v499
        %v569 = vpop.f32.mrb[0].mxu0
        %v570 = vadd.f32 0.0, %v569
        %v571 = vpop.f32.mrb[0].mxu0
        %572 = vdwg.mxu0
        %v573 = vadd.f32 %v490, %v570
        %s574 = scalar_lea.vmem %s1, 16
        %v575 = vld [vmem:[%s574] sm:$0xff]
        %576 = vrot.lane.b32.xlu0 %v408, 127
        %v577 = vpop.permute.xlu0 %576
        %v579 = vsel %vm409, %v575, 0
        %v581 = vsel %vm413, %v577, 0
        %583 = vmatprep.subr.mxu0 0.0
        %584 = vmatpush1.msra.mxu0 %v581
        %585 = vmatprep.subr.mxu0 0.0
        %586 = vmatpush1.msra.mxu0 0.0
        %587 = vmatprep.subr.mxu0 0.0
        %588 = vmatpush1.msra.mxu0 0.0
        %589 = vmatprep.subr.mxu0 0.0
        %590 = vmatpush1.msra.mxu0 0.0
        %591 = vmatprep.subr.mxu0 0.0
        %592 = vmatpush1.msra.mxu0 0.0
        %593 = vmatprep.subr.mxu0 0.0
        %594 = vmatpush1.msra.mxu0 0.0
        %595 = vmatprep.subr.mxu0 0.0
        %596 = vmatpush1.msra.mxu0 0.0
        %597 = vmatprep.subr.mxu0 0.0
        %598 = vmatpush1.msra.mxu0 0.0
        %599 = vmatprep.subr.mxu0 0.0
        %600 = vmatpush1.msra.mxu0 0.0
        %601 = vmatprep.subr.mxu0 0.0
        %602 = vmatpush1.msra.mxu0 0.0
        %603 = vmatprep.subr.mxu0 0.0
        %604 = vmatpush1.msra.mxu0 0.0
        %605 = vmatprep.subr.mxu0 0.0
        %606 = vmatpush1.msra.mxu0 0.0
        %607 = vmatprep.subr.mxu0 0.0
        %608 = vmatpush1.msra.mxu0 0.0
        %609 = vmatprep.subr.mxu0 0.0
        %610 = vmatpush1.msra.mxu0 0.0
        %611 = vmatprep.subr.mxu0 0.0
        %612 = vmatpush1.msra.mxu0 0.0
        %613 = vmatprep.subr.mxu0 0.0
        %614 = vmatpush1.msra.mxu0 0.0
        %615 = vmatprep.subr.mxu0 0.0
        %616 = vmatpush1.msra.mxu0 0.0
        %617 = vmatprep.subr.mxu0 0.0
        %618 = vmatpush1.msra.mxu0 0.0
        %619 = vmatprep.subr.mxu0 0.0
        %620 = vmatpush1.msra.mxu0 0.0
        %621 = vmatprep.subr.mxu0 0.0
        %622 = vmatpush1.msra.mxu0 0.0
        %623 = vmatprep.subr.mxu0 0.0
        %624 = vmatpush1.msra.mxu0 0.0
        %625 = vmatprep.subr.mxu0 0.0
        %626 = vmatpush1.msra.mxu0 0.0
        %627 = vmatprep.subr.mxu0 0.0
        %628 = vmatpush1.msra.mxu0 0.0
        %629 = vmatprep.subr.mxu0 0.0
        %630 = vmatpush1.msra.mxu0 0.0
        %631 = vmatprep.subr.mxu0 0.0
        %632 = vmatpush1.msra.mxu0 0.0
        %633 = vmatprep.subr.mxu0 0.0
        %634 = vmatpush1.msra.mxu0 0.0
        %635 = vmatprep.subr.mxu0 0.0
        %636 = vmatpush1.msra.mxu0 0.0
        %637 = vmatprep.subr.mxu0 0.0
        %638 = vmatpush1.msra.mxu0 0.0
        %639 = vmatprep.subr.mxu0 0.0
        %640 = vmatpush1.msra.mxu0 0.0
        %641 = vmatprep.subr.mxu0 0.0
        %642 = vmatpush1.msra.mxu0 0.0
        %643 = vmatprep.subr.mxu0 0.0
        %644 = vmatpush1.msra.mxu0 0.0
        %645 = vmatprep.subr.mxu0 0.0
        %646 = vmatpush1.msra.mxu0 0.0
        %647 = vmatprep.mubr.f32.mxu0 0.0
        %648 = vmatmul.mubr.f32.gmra.mrb[0].mxu0 %v579
        %v649 = vpop.f32.mrb[0].mxu0
        %v650 = vadd.f32 0.0, %v649
        %v651 = vpop.f32.mrb[0].mxu0
        %652 = vdwg.mxu0
        %v653 = vadd.f32 %v573, %v650
        %s654 = scalar_lea.vmem %s1, 24
        %v655 = vld [vmem:[%s654] sm:$0xff]
        %s656 = scalar_lea.vmem [#allocation2], 4
        %v657 = vld [vmem:[%s656] sm:$0xf]
        %659 = vrot.lane.b32.xlu0 %v657, 120
        %v660 = vpop.permute.xlu0 %659
        %v662 = vsel %vm409, %v655, 0
        %v664 = vsel %vm413, %v660, 0
        %666 = vmatprep.subr.mxu0 0.0
        %667 = vmatpush1.msra.mxu0 %v664
        %668 = vmatprep.subr.mxu0 0.0
        %669 = vmatpush1.msra.mxu0 0.0
        %670 = vmatprep.subr.mxu0 0.0
        %671 = vmatpush1.msra.mxu0 0.0
        %672 = vmatprep.subr.mxu0 0.0
        %673 = vmatpush1.msra.mxu0 0.0
        %674 = vmatprep.subr.mxu0 0.0
        %675 = vmatpush1.msra.mxu0 0.0
        %676 = vmatprep.subr.mxu0 0.0
        %677 = vmatpush1.msra.mxu0 0.0
        %678 = vmatprep.subr.mxu0 0.0
        %679 = vmatpush1.msra.mxu0 0.0
        %680 = vmatprep.subr.mxu0 0.0
        %681 = vmatpush1.msra.mxu0 0.0
        %682 = vmatprep.subr.mxu0 0.0
        %683 = vmatpush1.msra.mxu0 0.0
        %684 = vmatprep.subr.mxu0 0.0
        %685 = vmatpush1.msra.mxu0 0.0
        %686 = vmatprep.subr.mxu0 0.0
        %687 = vmatpush1.msra.mxu0 0.0
        %688 = vmatprep.subr.mxu0 0.0
        %689 = vmatpush1.msra.mxu0 0.0
        %690 = vmatprep.subr.mxu0 0.0
        %691 = vmatpush1.msra.mxu0 0.0
        %692 = vmatprep.subr.mxu0 0.0
        %693 = vmatpush1.msra.mxu0 0.0
        %694 = vmatprep.subr.mxu0 0.0
        %695 = vmatpush1.msra.mxu0 0.0
        %696 = vmatprep.subr.mxu0 0.0
        %697 = vmatpush1.msra.mxu0 0.0
        %698 = vmatprep.subr.mxu0 0.0
        %699 = vmatpush1.msra.mxu0 0.0
        %700 = vmatprep.subr.mxu0 0.0
        %701 = vmatpush1.msra.mxu0 0.0
        %702 = vmatprep.subr.mxu0 0.0
        %703 = vmatpush1.msra.mxu0 0.0
        %704 = vmatprep.subr.mxu0 0.0
        %705 = vmatpush1.msra.mxu0 0.0
        %706 = vmatprep.subr.mxu0 0.0
        %707 = vmatpush1.msra.mxu0 0.0
        %708 = vmatprep.subr.mxu0 0.0
        %709 = vmatpush1.msra.mxu0 0.0
        %710 = vmatprep.subr.mxu0 0.0
        %711 = vmatpush1.msra.mxu0 0.0
        %712 = vmatprep.subr.mxu0 0.0
        %713 = vmatpush1.msra.mxu0 0.0
        %714 = vmatprep.subr.mxu0 0.0
        %715 = vmatpush1.msra.mxu0 0.0
        %716 = vmatprep.subr.mxu0 0.0
        %717 = vmatpush1.msra.mxu0 0.0
        %718 = vmatprep.subr.mxu0 0.0
        %719 = vmatpush1.msra.mxu0 0.0
        %720 = vmatprep.subr.mxu0 0.0
        %721 = vmatpush1.msra.mxu0 0.0
        %722 = vmatprep.subr.mxu0 0.0
        %723 = vmatpush1.msra.mxu0 0.0
        %724 = vmatprep.subr.mxu0 0.0
        %725 = vmatpush1.msra.mxu0 0.0
        %726 = vmatprep.subr.mxu0 0.0
        %727 = vmatpush1.msra.mxu0 0.0
        %728 = vmatprep.subr.mxu0 0.0
        %729 = vmatpush1.msra.mxu0 0.0
        %730 = vmatprep.mubr.f32.mxu0 0.0
        %731 = vmatmul.mubr.f32.gmra.mrb[0].mxu0 %v662
        %v732 = vpop.f32.mrb[0].mxu0
        %v733 = vadd.f32 0.0, %v732
        %v734 = vpop.f32.mrb[0].mxu0
        %735 = vdwg.mxu0
        %v736 = vsel %vm488, %v733, 0.0
        %v737 = vadd.f32 %v653, %v736
        %s738 = scalar_lea.vmem %s1, 32
        %v739 = vld [vmem:[%s738] sm:$0xff]
        %v740 = vld [vmem:[#allocation2] sm:$0xf]
        %742 = vrot.lane.b32.xlu0 %v740, 119
        %v743 = vpop.permute.xlu0 %742
        %v745 = vsel %vm409, %v739, 0
        %v747 = vsel %vm413, %v743, 0
        %749 = vmatprep.subr.mxu0 0.0
        %750 = vmatpush1.msra.mxu0 %v747
        %751 = vmatprep.subr.mxu0 0.0
        %752 = vmatpush1.msra.mxu0 0.0
        %753 = vmatprep.subr.mxu0 0.0
        %754 = vmatpush1.msra.mxu0 0.0
        %755 = vmatprep.subr.mxu0 0.0
        %756 = vmatpush1.msra.mxu0 0.0
        %757 = vmatprep.subr.mxu0 0.0
        %758 = vmatpush1.msra.mxu0 0.0
        %759 = vmatprep.subr.mxu0 0.0
        %760 = vmatpush1.msra.mxu0 0.0
        %761 = vmatprep.subr.mxu0 0.0
        %762 = vmatpush1.msra.mxu0 0.0
        %763 = vmatprep.subr.mxu0 0.0
        %764 = vmatpush1.msra.mxu0 0.0
        %765 = vmatprep.subr.mxu0 0.0
        %766 = vmatpush1.msra.mxu0 0.0
        %767 = vmatprep.subr.mxu0 0.0
        %768 = vmatpush1.msra.mxu0 0.0
        %769 = vmatprep.subr.mxu0 0.0
        %770 = vmatpush1.msra.mxu0 0.0
        %771 = vmatprep.subr.mxu0 0.0
        %772 = vmatpush1.msra.mxu0 0.0
        %773 = vmatprep.subr.mxu0 0.0
        %774 = vmatpush1.msra.mxu0 0.0
        %775 = vmatprep.subr.mxu0 0.0
        %776 = vmatpush1.msra.mxu0 0.0
        %777 = vmatprep.subr.mxu0 0.0
        %778 = vmatpush1.msra.mxu0 0.0
        %779 = vmatprep.subr.mxu0 0.0
        %780 = vmatpush1.msra.mxu0 0.0
        %781 = vmatprep.subr.mxu0 0.0
        %782 = vmatpush1.msra.mxu0 0.0
        %783 = vmatprep.subr.mxu0 0.0
        %784 = vmatpush1.msra.mxu0 0.0
        %785 = vmatprep.subr.mxu0 0.0
        %786 = vmatpush1.msra.mxu0 0.0
        %787 = vmatprep.subr.mxu0 0.0
        %788 = vmatpush1.msra.mxu0 0.0
        %789 = vmatprep.subr.mxu0 0.0
        %790 = vmatpush1.msra.mxu0 0.0
        %791 = vmatprep.subr.mxu0 0.0
        %792 = vmatpush1.msra.mxu0 0.0
        %793 = vmatprep.subr.mxu0 0.0
        %794 = vmatpush1.msra.mxu0 0.0
        %795 = vmatprep.subr.mxu0 0.0
        %796 = vmatpush1.msra.mxu0 0.0
        %797 = vmatprep.subr.mxu0 0.0
        %798 = vmatpush1.msra.mxu0 0.0
        %799 = vmatprep.subr.mxu0 0.0
        %800 = vmatpush1.msra.mxu0 0.0
        %801 = vmatprep.subr.mxu0 0.0
        %802 = vmatpush1.msra.mxu0 0.0
        %803 = vmatprep.subr.mxu0 0.0
        %804 = vmatpush1.msra.mxu0 0.0
        %805 = vmatprep.subr.mxu0 0.0
        %806 = vmatpush1.msra.mxu0 0.0
        %807 = vmatprep.subr.mxu0 0.0
        %808 = vmatpush1.msra.mxu0 0.0
        %809 = vmatprep.subr.mxu0 0.0
        %810 = vmatpush1.msra.mxu0 0.0
        %811 = vmatprep.subr.mxu0 0.0
        %812 = vmatpush1.msra.mxu0 0.0
        %813 = vmatprep.mubr.f32.mxu0 0.0
        %814 = vmatmul.mubr.f32.gmra.mrb[0].mxu0 %v745
        %v815 = vpop.f32.mrb[0].mxu0
        %v816 = vadd.f32 0.0, %v815
        %v817 = vpop.f32.mrb[0].mxu0
        %818 = vdwg.mxu0
        %v819 = vadd.f32 %v737, %v816
        %s820 = scalar_lea.vmem %s1, 40
        %v821 = vld [vmem:[%s820] sm:$0xff]
        %822 = vrot.lane.b32.xlu0 %v657, 119
        %v823 = vpop.permute.xlu0 %822
        %v825 = vsel %vm409, %v821, 0
        %v827 = vsel %vm413, %v823, 0
        %829 = vmatprep.subr.mxu0 0.0
        %830 = vmatpush1.msra.mxu0 %v827
        %831 = vmatprep.subr.mxu0 0.0
        %832 = vmatpush1.msra.mxu0 0.0
        %833 = vmatprep.subr.mxu0 0.0
        %834 = vmatpush1.msra.mxu0 0.0
        %835 = vmatprep.subr.mxu0 0.0
        %836 = vmatpush1.msra.mxu0 0.0
        %837 = vmatprep.subr.mxu0 0.0
        %838 = vmatpush1.msra.mxu0 0.0
        %839 = vmatprep.subr.mxu0 0.0
        %840 = vmatpush1.msra.mxu0 0.0
        %841 = vmatprep.subr.mxu0 0.0
        %842 = vmatpush1.msra.mxu0 0.0
        %843 = vmatprep.subr.mxu0 0.0
        %844 = vmatpush1.msra.mxu0 0.0
        %845 = vmatprep.subr.mxu0 0.0
        %846 = vmatpush1.msra.mxu0 0.0
        %847 = vmatprep.subr.mxu0 0.0
        %848 = vmatpush1.msra.mxu0 0.0
        %849 = vmatprep.subr.mxu0 0.0
        %850 = vmatpush1.msra.mxu0 0.0
        %851 = vmatprep.subr.mxu0 0.0
        %852 = vmatpush1.msra.mxu0 0.0
        %853 = vmatprep.subr.mxu0 0.0
        %854 = vmatpush1.msra.mxu0 0.0
        %855 = vmatprep.subr.mxu0 0.0
        %856 = vmatpush1.msra.mxu0 0.0
        %857 = vmatprep.subr.mxu0 0.0
        %858 = vmatpush1.msra.mxu0 0.0
        %859 = vmatprep.subr.mxu0 0.0
        %860 = vmatpush1.msra.mxu0 0.0
        %861 = vmatprep.subr.mxu0 0.0
        %862 = vmatpush1.msra.mxu0 0.0
        %863 = vmatprep.subr.mxu0 0.0
        %864 = vmatpush1.msra.mxu0 0.0
        %865 = vmatprep.subr.mxu0 0.0
        %866 = vmatpush1.msra.mxu0 0.0
        %867 = vmatprep.subr.mxu0 0.0
        %868 = vmatpush1.msra.mxu0 0.0
        %869 = vmatprep.subr.mxu0 0.0
        %870 = vmatpush1.msra.mxu0 0.0
        %871 = vmatprep.subr.mxu0 0.0
        %872 = vmatpush1.msra.mxu0 0.0
        %873 = vmatprep.subr.mxu0 0.0
        %874 = vmatpush1.msra.mxu0 0.0
        %875 = vmatprep.subr.mxu0 0.0
        %876 = vmatpush1.msra.mxu0 0.0
        %877 = vmatprep.subr.mxu0 0.0
        %878 = vmatpush1.msra.mxu0 0.0
        %879 = vmatprep.subr.mxu0 0.0
        %880 = vmatpush1.msra.mxu0 0.0
        %881 = vmatprep.subr.mxu0 0.0
        %882 = vmatpush1.msra.mxu0 0.0
        %883 = vmatprep.subr.mxu0 0.0
        %884 = vmatpush1.msra.mxu0 0.0
        %885 = vmatprep.subr.mxu0 0.0
        %886 = vmatpush1.msra.mxu0 0.0
        %887 = vmatprep.subr.mxu0 0.0
        %888 = vmatpush1.msra.mxu0 0.0
        %889 = vmatprep.subr.mxu0 0.0
        %890 = vmatpush1.msra.mxu0 0.0
        %891 = vmatprep.subr.mxu0 0.0
        %892 = vmatpush1.msra.mxu0 0.0
        %893 = vmatprep.mubr.f32.mxu0 0.0
        %894 = vmatmul.mubr.f32.gmra.mrb[0].mxu0 %v825
        %v895 = vpop.f32.mrb[0].mxu0
        %v896 = vadd.f32 0.0, %v895
        %v897 = vpop.f32.mrb[0].mxu0
        %898 = vdwg.mxu0
        %v899 = vadd.f32 %v819, %v896
        %s900 = scalar_lea.vmem %s1, 48
        %v901 = vld [vmem:[%s900] sm:$0xff]
        %902 = vrot.lane.b32.xlu0 %v408, 120
        %v903 = vpop.permute.xlu0 %902
        %v905 = vsel %vm409, %v901, 0
        %v907 = vsel %vm413, %v903, 0
        %909 = vmatprep.subr.mxu0 0.0
        %910 = vmatpush1.msra.mxu0 %v907
        %911 = vmatprep.subr.mxu0 0.0
        %912 = vmatpush1.msra.mxu0 0.0
        %913 = vmatprep.subr.mxu0 0.0
        %914 = vmatpush1.msra.mxu0 0.0
        %915 = vmatprep.subr.mxu0 0.0
        %916 = vmatpush1.msra.mxu0 0.0
        %917 = vmatprep.subr.mxu0 0.0
        %918 = vmatpush1.msra.mxu0 0.0
        %919 = vmatprep.subr.mxu0 0.0
        %920 = vmatpush1.msra.mxu0 0.0
        %921 = vmatprep.subr.mxu0 0.0
        %922 = vmatpush1.msra.mxu0 0.0
        %923 = vmatprep.subr.mxu0 0.0
        %924 = vmatpush1.msra.mxu0 0.0
        %925 = vmatprep.subr.mxu0 0.0
        %926 = vmatpush1.msra.mxu0 0.0
        %927 = vmatprep.subr.mxu0 0.0
        %928 = vmatpush1.msra.mxu0 0.0
        %929 = vmatprep.subr.mxu0 0.0
        %930 = vmatpush1.msra.mxu0 0.0
        %931 = vmatprep.subr.mxu0 0.0
        %932 = vmatpush1.msra.mxu0 0.0
        %933 = vmatprep.subr.mxu0 0.0
        %934 = vmatpush1.msra.mxu0 0.0
        %935 = vmatprep.subr.mxu0 0.0
        %936 = vmatpush1.msra.mxu0 0.0
        %937 = vmatprep.subr.mxu0 0.0
        %938 = vmatpush1.msra.mxu0 0.0
        %939 = vmatprep.subr.mxu0 0.0
        %940 = vmatpush1.msra.mxu0 0.0
        %941 = vmatprep.subr.mxu0 0.0
        %942 = vmatpush1.msra.mxu0 0.0
        %943 = vmatprep.subr.mxu0 0.0
        %944 = vmatpush1.msra.mxu0 0.0
        %945 = vmatprep.subr.mxu0 0.0
        %946 = vmatpush1.msra.mxu0 0.0
        %947 = vmatprep.subr.mxu0 0.0
        %948 = vmatpush1.msra.mxu0 0.0
        %949 = vmatprep.subr.mxu0 0.0
        %950 = vmatpush1.msra.mxu0 0.0
        %951 = vmatprep.subr.mxu0 0.0
        %952 = vmatpush1.msra.mxu0 0.0
        %953 = vmatprep.subr.mxu0 0.0
        %954 = vmatpush1.msra.mxu0 0.0
        %955 = vmatprep.subr.mxu0 0.0
        %956 = vmatpush1.msra.mxu0 0.0
        %957 = vmatprep.subr.mxu0 0.0
        %958 = vmatpush1.msra.mxu0 0.0
        %959 = vmatprep.subr.mxu0 0.0
        %960 = vmatpush1.msra.mxu0 0.0
        %961 = vmatprep.subr.mxu0 0.0
        %962 = vmatpush1.msra.mxu0 0.0
        %963 = vmatprep.subr.mxu0 0.0
        %964 = vmatpush1.msra.mxu0 0.0
        %965 = vmatprep.subr.mxu0 0.0
        %966 = vmatpush1.msra.mxu0 0.0
        %967 = vmatprep.subr.mxu0 0.0
        %968 = vmatpush1.msra.mxu0 0.0
        %969 = vmatprep.subr.mxu0 0.0
        %970 = vmatpush1.msra.mxu0 0.0
        %971 = vmatprep.subr.mxu0 0.0
        %972 = vmatpush1.msra.mxu0 0.0
        %973 = vmatprep.mubr.f32.mxu0 0.0
        %974 = vmatmul.mubr.f32.gmra.mrb[0].mxu0 %v905
        %v975 = vpop.f32.mrb[0].mxu0
        %v976 = vadd.f32 0.0, %v975
        %v977 = vpop.f32.mrb[0].mxu0
        %978 = vdwg.mxu0
        %v979 = vsel %vm488, %v976, 0.0
        %v980 = vadd.f32 %v899, %v979
        %s981 = scalar_lea.vmem %s1, 56
        %v982 = vld [vmem:[%s981] sm:$0xff]
        %983 = vrot.lane.b32.xlu0 %v494, 119
        %v984 = vpop.permute.xlu0 %983
        %v986 = vsel %vm409, %v982, 0
        %v988 = vsel %vm413, %v984, 0
        %990 = vmatprep.subr.mxu0 0.0
        %991 = vmatpush1.msra.mxu0 %v988
        %992 = vmatprep.subr.mxu0 0.0
        %993 = vmatpush1.msra.mxu0 0.0
        %994 = vmatprep.subr.mxu0 0.0
        %995 = vmatpush1.msra.mxu0 0.0
        %996 = vmatprep.subr.mxu0 0.0
        %997 = vmatpush1.msra.mxu0 0.0
        %998 = vmatprep.subr.mxu0 0.0
        %999 = vmatpush1.msra.mxu0 0.0
        %1000 = vmatprep.subr.mxu0 0.0
        %1001 = vmatpush1.msra.mxu0 0.0
        %1002 = vmatprep.subr.mxu0 0.0
        %1003 = vmatpush1.msra.mxu0 0.0
        %1004 = vmatprep.subr.mxu0 0.0
        %1005 = vmatpush1.msra.mxu0 0.0
        %1006 = vmatprep.subr.mxu0 0.0
        %1007 = vmatpush1.msra.mxu0 0.0
        %1008 = vmatprep.subr.mxu0 0.0
        %1009 = vmatpush1.msra.mxu0 0.0
        %1010 = vmatprep.subr.mxu0 0.0
        %1011 = vmatpush1.msra.mxu0 0.0
        %1012 = vmatprep.subr.mxu0 0.0
        %1013 = vmatpush1.msra.mxu0 0.0
        %1014 = vmatprep.subr.mxu0 0.0
        %1015 = vmatpush1.msra.mxu0 0.0
        %1016 = vmatprep.subr.mxu0 0.0
        %1017 = vmatpush1.msra.mxu0 0.0
        %1018 = vmatprep.subr.mxu0 0.0
        %1019 = vmatpush1.msra.mxu0 0.0
        %1020 = vmatprep.subr.mxu0 0.0
        %1021 = vmatpush1.msra.mxu0 0.0
        %1022 = vmatprep.subr.mxu0 0.0
        %1023 = vmatpush1.msra.mxu0 0.0
        %1024 = vmatprep.subr.mxu0 0.0
        %1025 = vmatpush1.msra.mxu0 0.0
        %1026 = vmatprep.subr.mxu0 0.0
        %1027 = vmatpush1.msra.mxu0 0.0
        %1028 = vmatprep.subr.mxu0 0.0
        %1029 = vmatpush1.msra.mxu0 0.0
        %1030 = vmatprep.subr.mxu0 0.0
        %1031 = vmatpush1.msra.mxu0 0.0
        %1032 = vmatprep.subr.mxu0 0.0
        %1033 = vmatpush1.msra.mxu0 0.0
        %1034 = vmatprep.subr.mxu0 0.0
        %1035 = vmatpush1.msra.mxu0 0.0
        %1036 = vmatprep.subr.mxu0 0.0
        %1037 = vmatpush1.msra.mxu0 0.0
        %1038 = vmatprep.subr.mxu0 0.0
        %1039 = vmatpush1.msra.mxu0 0.0
        %1040 = vmatprep.subr.mxu0 0.0
        %1041 = vmatpush1.msra.mxu0 0.0
        %1042 = vmatprep.subr.mxu0 0.0
        %1043 = vmatpush1.msra.mxu0 0.0
        %1044 = vmatprep.subr.mxu0 0.0
        %1045 = vmatpush1.msra.mxu0 0.0
        %1046 = vmatprep.subr.mxu0 0.0
        %1047 = vmatpush1.msra.mxu0 0.0
        %1048 = vmatprep.subr.mxu0 0.0
        %1049 = vmatpush1.msra.mxu0 0.0
        %1050 = vmatprep.subr.mxu0 0.0
        %1051 = vmatpush1.msra.mxu0 0.0
        %1052 = vmatprep.subr.mxu0 0.0
        %1053 = vmatpush1.msra.mxu0 0.0
        %1054 = vmatprep.mubr.f32.mxu0 0.0
        %1055 = vmatmul.mubr.f32.gmra.mrb[0].mxu0 %v986
        %v1056 = vpop.f32.mrb[0].mxu0
        %v1057 = vadd.f32 0.0, %v1056
        %v1058 = vpop.f32.mrb[0].mxu0
        %1059 = vdwg.mxu0
        %v1060 = vadd.f32 %v980, %v1057
        %s1061 = scalar_lea.vmem %s1, 64
        %v1062 = vld [vmem:[%s1061] sm:$0xff]
        %1063 = vrot.lane.b32.xlu0 %v408, 119
        %v1064 = vpop.permute.xlu0 %1063
        %v1066 = vsel %vm409, %v1062, 0
        %v1068 = vsel %vm413, %v1064, 0
        %1070 = vmatprep.subr.mxu0 0.0
        %1071 = vmatpush1.msra.mxu0 %v1068
        %1072 = vmatprep.subr.mxu0 0.0
        %1073 = vmatpush1.msra.mxu0 0.0
        %1074 = vmatprep.subr.mxu0 0.0
        %1075 = vmatpush1.msra.mxu0 0.0
        %1076 = vmatprep.subr.mxu0 0.0
        %1077 = vmatpush1.msra.mxu0 0.0
        %1078 = vmatprep.subr.mxu0 0.0
        %1079 = vmatpush1.msra.mxu0 0.0
        %1080 = vmatprep.subr.mxu0 0.0
        %1081 = vmatpush1.msra.mxu0 0.0
        %1082 = vmatprep.subr.mxu0 0.0
        %1083 = vmatpush1.msra.mxu0 0.0
        %1084 = vmatprep.subr.mxu0 0.0
        %1085 = vmatpush1.msra.mxu0 0.0
        %1086 = vmatprep.subr.mxu0 0.0
        %1087 = vmatpush1.msra.mxu0 0.0
        %1088 = vmatprep.subr.mxu0 0.0
        %1089 = vmatpush1.msra.mxu0 0.0
        %1090 = vmatprep.subr.mxu0 0.0
        %1091 = vmatpush1.msra.mxu0 0.0
        %1092 = vmatprep.subr.mxu0 0.0
        %1093 = vmatpush1.msra.mxu0 0.0
        %1094 = vmatprep.subr.mxu0 0.0
        %1095 = vmatpush1.msra.mxu0 0.0
        %1096 = vmatprep.subr.mxu0 0.0
        %1097 = vmatpush1.msra.mxu0 0.0
        %1098 = vmatprep.subr.mxu0 0.0
        %1099 = vmatpush1.msra.mxu0 0.0
        %1100 = vmatprep.subr.mxu0 0.0
        %1101 = vmatpush1.msra.mxu0 0.0
        %1102 = vmatprep.subr.mxu0 0.0
        %1103 = vmatpush1.msra.mxu0 0.0
        %1104 = vmatprep.subr.mxu0 0.0
        %1105 = vmatpush1.msra.mxu0 0.0
        %1106 = vmatprep.subr.mxu0 0.0
        %1107 = vmatpush1.msra.mxu0 0.0
        %1108 = vmatprep.subr.mxu0 0.0
        %1109 = vmatpush1.msra.mxu0 0.0
        %1110 = vmatprep.subr.mxu0 0.0
        %1111 = vmatpush1.msra.mxu0 0.0
        %1112 = vmatprep.subr.mxu0 0.0
        %1113 = vmatpush1.msra.mxu0 0.0
        %1114 = vmatprep.subr.mxu0 0.0
        %1115 = vmatpush1.msra.mxu0 0.0
        %1116 = vmatprep.subr.mxu0 0.0
        %1117 = vmatpush1.msra.mxu0 0.0
        %1118 = vmatprep.subr.mxu0 0.0
        %1119 = vmatpush1.msra.mxu0 0.0
        %1120 = vmatprep.subr.mxu0 0.0
        %1121 = vmatpush1.msra.mxu0 0.0
        %1122 = vmatprep.subr.mxu0 0.0
        %1123 = vmatpush1.msra.mxu0 0.0
        %1124 = vmatprep.subr.mxu0 0.0
        %1125 = vmatpush1.msra.mxu0 0.0
        %1126 = vmatprep.subr.mxu0 0.0
        %1127 = vmatpush1.msra.mxu0 0.0
        %1128 = vmatprep.subr.mxu0 0.0
        %1129 = vmatpush1.msra.mxu0 0.0
        %1130 = vmatprep.subr.mxu0 0.0
        %1131 = vmatpush1.msra.mxu0 0.0
        %1132 = vmatprep.subr.mxu0 0.0
        %1133 = vmatpush1.msra.mxu0 0.0
        %1134 = vmatprep.mubr.f32.mxu0 0.0
        %1135 = vmatmul.mubr.f32.gmra.mrb[0].mxu0 %v1066
        %v1136 = vpop.f32.mrb[0].mxu0
        %v1137 = vadd.f32 0.0, %v1136
        %v1138 = vpop.f32.mrb[0].mxu0
        %1139 = vdwg.mxu0
        %v1140 = vadd.f32 %v1060, %v1137
        %1142 = vset.pattern.permute.xlu0 0
        %1143 = vperm.xlu0 %1142, %v377
        %v1144 = vpop.permute.xlu0 %1143
        %v1146 = vmul.f32 %v1140, %v1144
        %1148 = vset.pattern.permute.xlu0 0
        %1149 = vperm.xlu0 %1148, %v378
        %v1150 = vpop.permute.xlu0 %1149
        %v1152 = vadd.f32 %v1146, %v1150
        %v1153 = vmax.f32 %v1152, 0.0
        %1155 = vrot.lane.b32.xlu0 %v1153, 9
        %v1156 = vpop.permute.xlu0 %1155
        %vm1158 = vcmask 597064
        %1159 = vst.msk [vmem:[#allocation3] sm:$0xff] %vm1158, %v1156
        %v1160 = vld [vmem:[%s4] sm:$0xff]
        %v1161 = vld [vmem:[#allocation3] sm:$0xff]
        %vm1162 = vcmask 64512
        %v1164 = vsel %vm1162, %v1160, 0
        %1166 = vmatprep.subr.mxu0 0.0
        %1167 = vmatpush1.msra.mxu0 %v1161
        %1168 = vmatprep.subr.mxu0 0.0
        %1169 = vmatpush1.msra.mxu0 0.0
        %1170 = vmatprep.subr.mxu0 0.0
        %1171 = vmatpush1.msra.mxu0 0.0
        %1172 = vmatprep.subr.mxu0 0.0
        %1173 = vmatpush1.msra.mxu0 0.0
        %1174 = vmatprep.subr.mxu0 0.0
        %1175 = vmatpush1.msra.mxu0 0.0
        %1176 = vmatprep.subr.mxu0 0.0
        %1177 = vmatpush1.msra.mxu0 0.0
        %1178 = vmatprep.subr.mxu0 0.0
        %1179 = vmatpush1.msra.mxu0 0.0
        %1180 = vmatprep.subr.mxu0 0.0
        %1181 = vmatpush1.msra.mxu0 0.0
        %1182 = vmatprep.subr.mxu0 0.0
        %1183 = vmatpush1.msra.mxu0 0.0
        %1184 = vmatprep.subr.mxu0 0.0
        %1185 = vmatpush1.msra.mxu0 0.0
        %1186 = vmatprep.subr.mxu0 0.0
        %1187 = vmatpush1.msra.mxu0 0.0
        %1188 = vmatprep.subr.mxu0 0.0
        %1189 = vmatpush1.msra.mxu0 0.0
        %1190 = vmatprep.subr.mxu0 0.0
        %1191 = vmatpush1.msra.mxu0 0.0
        %1192 = vmatprep.subr.mxu0 0.0
        %1193 = vmatpush1.msra.mxu0 0.0
        %1194 = vmatprep.subr.mxu0 0.0
        %1195 = vmatpush1.msra.mxu0 0.0
        %1196 = vmatprep.subr.mxu0 0.0
        %1197 = vmatpush1.msra.mxu0 0.0
        %1198 = vmatprep.subr.mxu0 0.0
        %1199 = vmatpush1.msra.mxu0 0.0
        %1200 = vmatprep.subr.mxu0 0.0
        %1201 = vmatpush1.msra.mxu0 0.0
        %1202 = vmatprep.subr.mxu0 0.0
        %1203 = vmatpush1.msra.mxu0 0.0
        %1204 = vmatprep.subr.mxu0 0.0
        %1205 = vmatpush1.msra.mxu0 0.0
        %1206 = vmatprep.subr.mxu0 0.0
        %1207 = vmatpush1.msra.mxu0 0.0
        %1208 = vmatprep.subr.mxu0 0.0
        %1209 = vmatpush1.msra.mxu0 0.0
        %1210 = vmatprep.subr.mxu0 0.0
        %1211 = vmatpush1.msra.mxu0 0.0
        %1212 = vmatprep.subr.mxu0 0.0
        %1213 = vmatpush1.msra.mxu0 0.0
        %1214 = vmatprep.subr.mxu0 0.0
        %1215 = vmatpush1.msra.mxu0 0.0
        %1216 = vmatprep.subr.mxu0 0.0
        %1217 = vmatpush1.msra.mxu0 0.0
        %1218 = vmatprep.subr.mxu0 0.0
        %1219 = vmatpush1.msra.mxu0 0.0
        %1220 = vmatprep.subr.mxu0 0.0
        %1221 = vmatpush1.msra.mxu0 0.0
        %1222 = vmatprep.subr.mxu0 0.0
        %1223 = vmatpush1.msra.mxu0 0.0
        %1224 = vmatprep.subr.mxu0 0.0
        %1225 = vmatpush1.msra.mxu0 0.0
        %1226 = vmatprep.subr.mxu0 0.0
        %1227 = vmatpush1.msra.mxu0 0.0
        %1228 = vmatprep.subr.mxu0 0.0
        %1229 = vmatpush1.msra.mxu0 0.0
        %1230 = vmatprep.mubr.f32.mxu0 0.0
        %1231 = vmatmul.mubr.f32.gmra.mrb[0].mxu0 %v1164
        %v1232 = vpop.f32.mrb[0].mxu0
        %v1233 = vadd.f32 0.0, %v1232
        %v1234 = vpop.f32.mrb[0].mxu0
        %1235 = vdwg.mxu0
        %v1236 = vsel %vm488, %v1233, 0.0
        %v1237 = vadd.f32 %v1236, 0.0
        %s1238 = scalar_lea.vmem %s4, 8
        %v1239 = vld [vmem:[%s1238] sm:$0xff]
        %1241 = vrot.lane.b32.xlu0 %v1161, 127
        %v1242 = vpop.permute.xlu0 %1241
        %v1245 = vsel %vm1162, %v1239, 0
        %1247 = vmatprep.subr.mxu0 0.0
        %1248 = vmatpush1.msra.mxu0 %v1242
        %1249 = vmatprep.subr.mxu0 0.0
        %1250 = vmatpush1.msra.mxu0 0.0
        %1251 = vmatprep.subr.mxu0 0.0
        %1252 = vmatpush1.msra.mxu0 0.0
        %1253 = vmatprep.subr.mxu0 0.0
        %1254 = vmatpush1.msra.mxu0 0.0
        %1255 = vmatprep.subr.mxu0 0.0
        %1256 = vmatpush1.msra.mxu0 0.0
        %1257 = vmatprep.subr.mxu0 0.0
        %1258 = vmatpush1.msra.mxu0 0.0
        %1259 = vmatprep.subr.mxu0 0.0
        %1260 = vmatpush1.msra.mxu0 0.0
        %1261 = vmatprep.subr.mxu0 0.0
        %1262 = vmatpush1.msra.mxu0 0.0
        %1263 = vmatprep.subr.mxu0 0.0
        %1264 = vmatpush1.msra.mxu0 0.0
        %1265 = vmatprep.subr.mxu0 0.0
        %1266 = vmatpush1.msra.mxu0 0.0
        %1267 = vmatprep.subr.mxu0 0.0
        %1268 = vmatpush1.msra.mxu0 0.0
        %1269 = vmatprep.subr.mxu0 0.0
        %1270 = vmatpush1.msra.mxu0 0.0
        %1271 = vmatprep.subr.mxu0 0.0
        %1272 = vmatpush1.msra.mxu0 0.0
        %1273 = vmatprep.subr.mxu0 0.0
        %1274 = vmatpush1.msra.mxu0 0.0
        %1275 = vmatprep.subr.mxu0 0.0
        %1276 = vmatpush1.msra.mxu0 0.0
        %1277 = vmatprep.subr.mxu0 0.0
        %1278 = vmatpush1.msra.mxu0 0.0
        %1279 = vmatprep.subr.mxu0 0.0
        %1280 = vmatpush1.msra.mxu0 0.0
        %1281 = vmatprep.subr.mxu0 0.0
        %1282 = vmatpush1.msra.mxu0 0.0
        %1283 = vmatprep.subr.mxu0 0.0
        %1284 = vmatpush1.msra.mxu0 0.0
        %1285 = vmatprep.subr.mxu0 0.0
        %1286 = vmatpush1.msra.mxu0 0.0
        %1287 = vmatprep.subr.mxu0 0.0
        %1288 = vmatpush1.msra.mxu0 0.0
        %1289 = vmatprep.subr.mxu0 0.0
        %1290 = vmatpush1.msra.mxu0 0.0
        %1291 = vmatprep.subr.mxu0 0.0
        %1292 = vmatpush1.msra.mxu0 0.0
        %1293 = vmatprep.subr.mxu0 0.0
        %1294 = vmatpush1.msra.mxu0 0.0
        %1295 = vmatprep.subr.mxu0 0.0
        %1296 = vmatpush1.msra.mxu0 0.0
        %1297 = vmatprep.subr.mxu0 0.0
        %1298 = vmatpush1.msra.mxu0 0.0
        %1299 = vmatprep.subr.mxu0 0.0
        %1300 = vmatpush1.msra.mxu0 0.0
        %1301 = vmatprep.subr.mxu0 0.0
        %1302 = vmatpush1.msra.mxu0 0.0
        %1303 = vmatprep.subr.mxu0 0.0
        %1304 = vmatpush1.msra.mxu0 0.0
        %1305 = vmatprep.subr.mxu0 0.0
        %1306 = vmatpush1.msra.mxu0 0.0
        %1307 = vmatprep.subr.mxu0 0.0
        %1308 = vmatpush1.msra.mxu0 0.0
        %1309 = vmatprep.subr.mxu0 0.0
        %1310 = vmatpush1.msra.mxu0 0.0
        %1311 = vmatprep.mubr.f32.mxu0 0.0
        %1312 = vmatmul.mubr.f32.gmra.mrb[0].mxu0 %v1245
        %v1313 = vpop.f32.mrb[0].mxu0
        %v1314 = vadd.f32 0.0, %v1313
        %v1315 = vpop.f32.mrb[0].mxu0
        %1316 = vdwg.mxu0
        %v1317 = vadd.f32 %v1237, %v1314
        %s1318 = scalar_lea.vmem %s4, 16
        %v1319 = vld [vmem:[%s1318] sm:$0xff]
        %1320 = vrot.lane.b32.xlu0 %v1161, 126
        %v1321 = vpop.permute.xlu0 %1320
        %v1324 = vsel %vm1162, %v1319, 0
        %1326 = vmatprep.subr.mxu0 0.0
        %1327 = vmatpush1.msra.mxu0 %v1321
        %1328 = vmatprep.subr.mxu0 0.0
        %1329 = vmatpush1.msra.mxu0 0.0
        %1330 = vmatprep.subr.mxu0 0.0
        %1331 = vmatpush1.msra.mxu0 0.0
        %1332 = vmatprep.subr.mxu0 0.0
        %1333 = vmatpush1.msra.mxu0 0.0
        %1334 = vmatprep.subr.mxu0 0.0
        %1335 = vmatpush1.msra.mxu0 0.0
        %1336 = vmatprep.subr.mxu0 0.0
        %1337 = vmatpush1.msra.mxu0 0.0
        %1338 = vmatprep.subr.mxu0 0.0
        %1339 = vmatpush1.msra.mxu0 0.0
        %1340 = vmatprep.subr.mxu0 0.0
        %1341 = vmatpush1.msra.mxu0 0.0
        %1342 = vmatprep.subr.mxu0 0.0
        %1343 = vmatpush1.msra.mxu0 0.0
        %1344 = vmatprep.subr.mxu0 0.0
        %1345 = vmatpush1.msra.mxu0 0.0
        %1346 = vmatprep.subr.mxu0 0.0
        %1347 = vmatpush1.msra.mxu0 0.0
        %1348 = vmatprep.subr.mxu0 0.0
        %1349 = vmatpush1.msra.mxu0 0.0
        %1350 = vmatprep.subr.mxu0 0.0
        %1351 = vmatpush1.msra.mxu0 0.0
        %1352 = vmatprep.subr.mxu0 0.0
        %1353 = vmatpush1.msra.mxu0 0.0
        %1354 = vmatprep.subr.mxu0 0.0
        %1355 = vmatpush1.msra.mxu0 0.0
        %1356 = vmatprep.subr.mxu0 0.0
        %1357 = vmatpush1.msra.mxu0 0.0
        %1358 = vmatprep.subr.mxu0 0.0
        %1359 = vmatpush1.msra.mxu0 0.0
        %1360 = vmatprep.subr.mxu0 0.0
        %1361 = vmatpush1.msra.mxu0 0.0
        %1362 = vmatprep.subr.mxu0 0.0
        %1363 = vmatpush1.msra.mxu0 0.0
        %1364 = vmatprep.subr.mxu0 0.0
        %1365 = vmatpush1.msra.mxu0 0.0
        %1366 = vmatprep.subr.mxu0 0.0
        %1367 = vmatpush1.msra.mxu0 0.0
        %1368 = vmatprep.subr.mxu0 0.0
        %1369 = vmatpush1.msra.mxu0 0.0
        %1370 = vmatprep.subr.mxu0 0.0
        %1371 = vmatpush1.msra.mxu0 0.0
        %1372 = vmatprep.subr.mxu0 0.0
        %1373 = vmatpush1.msra.mxu0 0.0
        %1374 = vmatprep.subr.mxu0 0.0
        %1375 = vmatpush1.msra.mxu0 0.0
        %1376 = vmatprep.subr.mxu0 0.0
        %1377 = vmatpush1.msra.mxu0 0.0
        %1378 = vmatprep.subr.mxu0 0.0
        %1379 = vmatpush1.msra.mxu0 0.0
        %1380 = vmatprep.subr.mxu0 0.0
        %1381 = vmatpush1.msra.mxu0 0.0
        %1382 = vmatprep.subr.mxu0 0.0
        %1383 = vmatpush1.msra.mxu0 0.0
        %1384 = vmatprep.subr.mxu0 0.0
        %1385 = vmatpush1.msra.mxu0 0.0
        %1386 = vmatprep.subr.mxu0 0.0
        %1387 = vmatpush1.msra.mxu0 0.0
        %1388 = vmatprep.subr.mxu0 0.0
        %1389 = vmatpush1.msra.mxu0 0.0
        %1390 = vmatprep.mubr.f32.mxu0 0.0
        %1391 = vmatmul.mubr.f32.gmra.mrb[0].mxu0 %v1324
        %v1392 = vpop.f32.mrb[0].mxu0
        %v1393 = vadd.f32 0.0, %v1392
        %v1394 = vpop.f32.mrb[0].mxu0
        %1395 = vdwg.mxu0
        %v1396 = vsel %vm362, 1, 0
        %vm1397 = vcmp.eq.s32.totalorder %v1396, 1
        %v1398 = vsel %vm1397, %v1393, 0.0
        %v1399 = vadd.f32 %v1317, %v1398
        %s1400 = scalar_lea.vmem %s4, 24
        %v1401 = vld [vmem:[%s1400] sm:$0xff]
        %1402 = vrot.lane.b32.xlu0 %v1161, 120
        %v1403 = vpop.permute.xlu0 %1402
        %v1406 = vsel %vm1162, %v1401, 0
        %1408 = vmatprep.subr.mxu0 0.0
        %1409 = vmatpush1.msra.mxu0 %v1403
        %1410 = vmatprep.subr.mxu0 0.0
        %1411 = vmatpush1.msra.mxu0 0.0
        %1412 = vmatprep.subr.mxu0 0.0
        %1413 = vmatpush1.msra.mxu0 0.0
        %1414 = vmatprep.subr.mxu0 0.0
        %1415 = vmatpush1.msra.mxu0 0.0
        %1416 = vmatprep.subr.mxu0 0.0
        %1417 = vmatpush1.msra.mxu0 0.0
        %1418 = vmatprep.subr.mxu0 0.0
        %1419 = vmatpush1.msra.mxu0 0.0
        %1420 = vmatprep.subr.mxu0 0.0
        %1421 = vmatpush1.msra.mxu0 0.0
        %1422 = vmatprep.subr.mxu0 0.0
        %1423 = vmatpush1.msra.mxu0 0.0
        %1424 = vmatprep.subr.mxu0 0.0
        %1425 = vmatpush1.msra.mxu0 0.0
        %1426 = vmatprep.subr.mxu0 0.0
        %1427 = vmatpush1.msra.mxu0 0.0
        %1428 = vmatprep.subr.mxu0 0.0
        %1429 = vmatpush1.msra.mxu0 0.0
        %1430 = vmatprep.subr.mxu0 0.0
        %1431 = vmatpush1.msra.mxu0 0.0
        %1432 = vmatprep.subr.mxu0 0.0
        %1433 = vmatpush1.msra.mxu0 0.0
        %1434 = vmatprep.subr.mxu0 0.0
        %1435 = vmatpush1.msra.mxu0 0.0
        %1436 = vmatprep.subr.mxu0 0.0
        %1437 = vmatpush1.msra.mxu0 0.0
        %1438 = vmatprep.subr.mxu0 0.0
        %1439 = vmatpush1.msra.mxu0 0.0
        %1440 = vmatprep.subr.mxu0 0.0
        %1441 = vmatpush1.msra.mxu0 0.0
        %1442 = vmatprep.subr.mxu0 0.0
        %1443 = vmatpush1.msra.mxu0 0.0
        %1444 = vmatprep.subr.mxu0 0.0
        %1445 = vmatpush1.msra.mxu0 0.0
        %1446 = vmatprep.subr.mxu0 0.0
        %1447 = vmatpush1.msra.mxu0 0.0
        %1448 = vmatprep.subr.mxu0 0.0
        %1449 = vmatpush1.msra.mxu0 0.0
        %1450 = vmatprep.subr.mxu0 0.0
        %1451 = vmatpush1.msra.mxu0 0.0
        %1452 = vmatprep.subr.mxu0 0.0
        %1453 = vmatpush1.msra.mxu0 0.0
        %1454 = vmatprep.subr.mxu0 0.0
        %1455 = vmatpush1.msra.mxu0 0.0
        %1456 = vmatprep.subr.mxu0 0.0
        %1457 = vmatpush1.msra.mxu0 0.0
        %1458 = vmatprep.subr.mxu0 0.0
        %1459 = vmatpush1.msra.mxu0 0.0
        %1460 = vmatprep.subr.mxu0 0.0
        %1461 = vmatpush1.msra.mxu0 0.0
        %1462 = vmatprep.subr.mxu0 0.0
        %1463 = vmatpush1.msra.mxu0 0.0
        %1464 = vmatprep.subr.mxu0 0.0
        %1465 = vmatpush1.msra.mxu0 0.0
        %1466 = vmatprep.subr.mxu0 0.0
        %1467 = vmatpush1.msra.mxu0 0.0
        %1468 = vmatprep.subr.mxu0 0.0
        %1469 = vmatpush1.msra.mxu0 0.0
        %1470 = vmatprep.subr.mxu0 0.0
        %1471 = vmatpush1.msra.mxu0 0.0
        %1472 = vmatprep.mubr.f32.mxu0 0.0
        %1473 = vmatmul.mubr.f32.gmra.mrb[0].mxu0 %v1406
        %v1474 = vpop.f32.mrb[0].mxu0
        %v1475 = vadd.f32 0.0, %v1474
        %v1476 = vpop.f32.mrb[0].mxu0
        %1477 = vdwg.mxu0
        %v1478 = vsel %vm488, %v1475, 0.0
        %v1479 = vadd.f32 %v1399, %v1478
        %s1480 = scalar_lea.vmem %s4, 32
        %v1481 = vld [vmem:[%s1480] sm:$0xff]
        %1482 = vrot.lane.b32.xlu0 %v1161, 119
        %v1483 = vpop.permute.xlu0 %1482
        %v1486 = vsel %vm1162, %v1481, 0
        %1488 = vmatprep.subr.mxu0 0.0
        %1489 = vmatpush1.msra.mxu0 %v1483
        %1490 = vmatprep.subr.mxu0 0.0
        %1491 = vmatpush1.msra.mxu0 0.0
        %1492 = vmatprep.subr.mxu0 0.0
        %1493 = vmatpush1.msra.mxu0 0.0
        %1494 = vmatprep.subr.mxu0 0.0
        %1495 = vmatpush1.msra.mxu0 0.0
        %1496 = vmatprep.subr.mxu0 0.0
        %1497 = vmatpush1.msra.mxu0 0.0
        %1498 = vmatprep.subr.mxu0 0.0
        %1499 = vmatpush1.msra.mxu0 0.0
        %1500 = vmatprep.subr.mxu0 0.0
        %1501 = vmatpush1.msra.mxu0 0.0
        %1502 = vmatprep.subr.mxu0 0.0
        %1503 = vmatpush1.msra.mxu0 0.0
        %1504 = vmatprep.subr.mxu0 0.0
        %1505 = vmatpush1.msra.mxu0 0.0
        %1506 = vmatprep.subr.mxu0 0.0
        %1507 = vmatpush1.msra.mxu0 0.0
        %1508 = vmatprep.subr.mxu0 0.0
        %1509 = vmatpush1.msra.mxu0 0.0
        %1510 = vmatprep.subr.mxu0 0.0
        %1511 = vmatpush1.msra.mxu0 0.0
        %1512 = vmatprep.subr.mxu0 0.0
        %1513 = vmatpush1.msra.mxu0 0.0
        %1514 = vmatprep.subr.mxu0 0.0
        %1515 = vmatpush1.msra.mxu0 0.0
        %1516 = vmatprep.subr.mxu0 0.0
        %1517 = vmatpush1.msra.mxu0 0.0
        %1518 = vmatprep.subr.mxu0 0.0
        %1519 = vmatpush1.msra.mxu0 0.0
        %1520 = vmatprep.subr.mxu0 0.0
        %1521 = vmatpush1.msra.mxu0 0.0
        %1522 = vmatprep.subr.mxu0 0.0
        %1523 = vmatpush1.msra.mxu0 0.0
        %1524 = vmatprep.subr.mxu0 0.0
        %1525 = vmatpush1.msra.mxu0 0.0
        %1526 = vmatprep.subr.mxu0 0.0
        %1527 = vmatpush1.msra.mxu0 0.0
        %1528 = vmatprep.subr.mxu0 0.0
        %1529 = vmatpush1.msra.mxu0 0.0
        %1530 = vmatprep.subr.mxu0 0.0
        %1531 = vmatpush1.msra.mxu0 0.0
        %1532 = vmatprep.subr.mxu0 0.0
        %1533 = vmatpush1.msra.mxu0 0.0
        %1534 = vmatprep.subr.mxu0 0.0
        %1535 = vmatpush1.msra.mxu0 0.0
        %1536 = vmatprep.subr.mxu0 0.0
        %1537 = vmatpush1.msra.mxu0 0.0
        %1538 = vmatprep.subr.mxu0 0.0
        %1539 = vmatpush1.msra.mxu0 0.0
        %1540 = vmatprep.subr.mxu0 0.0
        %1541 = vmatpush1.msra.mxu0 0.0
        %1542 = vmatprep.subr.mxu0 0.0
        %1543 = vmatpush1.msra.mxu0 0.0
        %1544 = vmatprep.subr.mxu0 0.0
        %1545 = vmatpush1.msra.mxu0 0.0
        %1546 = vmatprep.subr.mxu0 0.0
        %1547 = vmatpush1.msra.mxu0 0.0
        %1548 = vmatprep.subr.mxu0 0.0
        %1549 = vmatpush1.msra.mxu0 0.0
        %1550 = vmatprep.subr.mxu0 0.0
        %1551 = vmatpush1.msra.mxu0 0.0
        %1552 = vmatprep.mubr.f32.mxu0 0.0
        %1553 = vmatmul.mubr.f32.gmra.mrb[0].mxu0 %v1486
        %v1554 = vpop.f32.mrb[0].mxu0
        %v1555 = vadd.f32 0.0, %v1554
        %v1556 = vpop.f32.mrb[0].mxu0
        %1557 = vdwg.mxu0
        %v1558 = vadd.f32 %v1479, %v1555
        %s1559 = scalar_lea.vmem %s4, 40
        %v1560 = vld [vmem:[%s1559] sm:$0xff]
        %1561 = vrot.lane.b32.xlu0 %v1161, 118
        %v1562 = vpop.permute.xlu0 %1561
        %v1565 = vsel %vm1162, %v1560, 0
        %1567 = vmatprep.subr.mxu0 0.0
        %1568 = vmatpush1.msra.mxu0 %v1562
        %1569 = vmatprep.subr.mxu0 0.0
        %1570 = vmatpush1.msra.mxu0 0.0
        %1571 = vmatprep.subr.mxu0 0.0
        %1572 = vmatpush1.msra.mxu0 0.0
        %1573 = vmatprep.subr.mxu0 0.0
        %1574 = vmatpush1.msra.mxu0 0.0
        %1575 = vmatprep.subr.mxu0 0.0
        %1576 = vmatpush1.msra.mxu0 0.0
        %1577 = vmatprep.subr.mxu0 0.0
        %1578 = vmatpush1.msra.mxu0 0.0
        %1579 = vmatprep.subr.mxu0 0.0
        %1580 = vmatpush1.msra.mxu0 0.0
        %1581 = vmatprep.subr.mxu0 0.0
        %1582 = vmatpush1.msra.mxu0 0.0
        %1583 = vmatprep.subr.mxu0 0.0
        %1584 = vmatpush1.msra.mxu0 0.0
        %1585 = vmatprep.subr.mxu0 0.0
        %1586 = vmatpush1.msra.mxu0 0.0
        %1587 = vmatprep.subr.mxu0 0.0
        %1588 = vmatpush1.msra.mxu0 0.0
        %1589 = vmatprep.subr.mxu0 0.0
        %1590 = vmatpush1.msra.mxu0 0.0
        %1591 = vmatprep.subr.mxu0 0.0
        %1592 = vmatpush1.msra.mxu0 0.0
        %1593 = vmatprep.subr.mxu0 0.0
        %1594 = vmatpush1.msra.mxu0 0.0
        %1595 = vmatprep.subr.mxu0 0.0
        %1596 = vmatpush1.msra.mxu0 0.0
        %1597 = vmatprep.subr.mxu0 0.0
        %1598 = vmatpush1.msra.mxu0 0.0
        %1599 = vmatprep.subr.mxu0 0.0
        %1600 = vmatpush1.msra.mxu0 0.0
        %1601 = vmatprep.subr.mxu0 0.0
        %1602 = vmatpush1.msra.mxu0 0.0
        %1603 = vmatprep.subr.mxu0 0.0
        %1604 = vmatpush1.msra.mxu0 0.0
        %1605 = vmatprep.subr.mxu0 0.0
        %1606 = vmatpush1.msra.mxu0 0.0
        %1607 = vmatprep.subr.mxu0 0.0
        %1608 = vmatpush1.msra.mxu0 0.0
        %1609 = vmatprep.subr.mxu0 0.0
        %1610 = vmatpush1.msra.mxu0 0.0
        %1611 = vmatprep.subr.mxu0 0.0
        %1612 = vmatpush1.msra.mxu0 0.0
        %1613 = vmatprep.subr.mxu0 0.0
        %1614 = vmatpush1.msra.mxu0 0.0
        %1615 = vmatprep.subr.mxu0 0.0
        %1616 = vmatpush1.msra.mxu0 0.0
        %1617 = vmatprep.subr.mxu0 0.0
        %1618 = vmatpush1.msra.mxu0 0.0
        %1619 = vmatprep.subr.mxu0 0.0
        %1620 = vmatpush1.msra.mxu0 0.0
        %1621 = vmatprep.subr.mxu0 0.0
        %1622 = vmatpush1.msra.mxu0 0.0
        %1623 = vmatprep.subr.mxu0 0.0
        %1624 = vmatpush1.msra.mxu0 0.0
        %1625 = vmatprep.subr.mxu0 0.0
        %1626 = vmatpush1.msra.mxu0 0.0
        %1627 = vmatprep.subr.mxu0 0.0
        %1628 = vmatpush1.msra.mxu0 0.0
        %1629 = vmatprep.subr.mxu0 0.0
        %1630 = vmatpush1.msra.mxu0 0.0
        %1631 = vmatprep.mubr.f32.mxu0 0.0
        %1632 = vmatmul.mubr.f32.gmra.mrb[0].mxu0 %v1565
        %v1633 = vpop.f32.mrb[0].mxu0
        %v1634 = vadd.f32 0.0, %v1633
        %v1635 = vpop.f32.mrb[0].mxu0
        %1636 = vdwg.mxu0
        %v1637 = vsel %vm1397, %v1634, 0.0
        %v1638 = vadd.f32 %v1558, %v1637
        %s1639 = scalar_lea.vmem %s4, 48
        %v1640 = vld [vmem:[%s1639] sm:$0xff]
        %1641 = vrot.lane.b32.xlu0 %v1161, 112
        %v1642 = vpop.permute.xlu0 %1641
        %v1645 = vsel %vm1162, %v1640, 0
        %1647 = vmatprep.subr.mxu0 0.0
        %1648 = vmatpush1.msra.mxu0 %v1642
        %1649 = vmatprep.subr.mxu0 0.0
        %1650 = vmatpush1.msra.mxu0 0.0
        %1651 = vmatprep.subr.mxu0 0.0
        %1652 = vmatpush1.msra.mxu0 0.0
        %1653 = vmatprep.subr.mxu0 0.0
        %1654 = vmatpush1.msra.mxu0 0.0
        %1655 = vmatprep.subr.mxu0 0.0
        %1656 = vmatpush1.msra.mxu0 0.0
        %1657 = vmatprep.subr.mxu0 0.0
        %1658 = vmatpush1.msra.mxu0 0.0
        %1659 = vmatprep.subr.mxu0 0.0
        %1660 = vmatpush1.msra.mxu0 0.0
        %1661 = vmatprep.subr.mxu0 0.0
        %1662 = vmatpush1.msra.mxu0 0.0
        %1663 = vmatprep.subr.mxu0 0.0
        %1664 = vmatpush1.msra.mxu0 0.0
        %1665 = vmatprep.subr.mxu0 0.0
        %1666 = vmatpush1.msra.mxu0 0.0
        %1667 = vmatprep.subr.mxu0 0.0
        %1668 = vmatpush1.msra.mxu0 0.0
        %1669 = vmatprep.subr.mxu0 0.0
        %1670 = vmatpush1.msra.mxu0 0.0
        %1671 = vmatprep.subr.mxu0 0.0
        %1672 = vmatpush1.msra.mxu0 0.0
        %1673 = vmatprep.subr.mxu0 0.0
        %1674 = vmatpush1.msra.mxu0 0.0
        %1675 = vmatprep.subr.mxu0 0.0
        %1676 = vmatpush1.msra.mxu0 0.0
        %1677 = vmatprep.subr.mxu0 0.0
        %1678 = vmatpush1.msra.mxu0 0.0
        %1679 = vmatprep.subr.mxu0 0.0
        %1680 = vmatpush1.msra.mxu0 0.0
        %1681 = vmatprep.subr.mxu0 0.0
        %1682 = vmatpush1.msra.mxu0 0.0
        %1683 = vmatprep.subr.mxu0 0.0
        %1684 = vmatpush1.msra.mxu0 0.0
        %1685 = vmatprep.subr.mxu0 0.0
        %1686 = vmatpush1.msra.mxu0 0.0
        %1687 = vmatprep.subr.mxu0 0.0
        %1688 = vmatpush1.msra.mxu0 0.0
        %1689 = vmatprep.subr.mxu0 0.0
        %1690 = vmatpush1.msra.mxu0 0.0
        %1691 = vmatprep.subr.mxu0 0.0
        %1692 = vmatpush1.msra.mxu0 0.0
        %1693 = vmatprep.subr.mxu0 0.0
        %1694 = vmatpush1.msra.mxu0 0.0
        %1695 = vmatprep.subr.mxu0 0.0
        %1696 = vmatpush1.msra.mxu0 0.0
        %1697 = vmatprep.subr.mxu0 0.0
        %1698 = vmatpush1.msra.mxu0 0.0
        %1699 = vmatprep.subr.mxu0 0.0
        %1700 = vmatpush1.msra.mxu0 0.0
        %1701 = vmatprep.subr.mxu0 0.0
        %1702 = vmatpush1.msra.mxu0 0.0
        %1703 = vmatprep.subr.mxu0 0.0
        %1704 = vmatpush1.msra.mxu0 0.0
        %1705 = vmatprep.subr.mxu0 0.0
        %1706 = vmatpush1.msra.mxu0 0.0
        %1707 = vmatprep.subr.mxu0 0.0
        %1708 = vmatpush1.msra.mxu0 0.0
        %1709 = vmatprep.subr.mxu0 0.0
        %1710 = vmatpush1.msra.mxu0 0.0
        %1711 = vmatprep.mubr.f32.mxu0 0.0
        %1712 = vmatmul.mubr.f32.gmra.mrb[0].mxu0 %v1645
        %v1713 = vpop.f32.mrb[0].mxu0
        %v1714 = vadd.f32 0.0, %v1713
        %v1715 = vpop.f32.mrb[0].mxu0
        %1716 = vdwg.mxu0
        %v1717 = vsel %vm488, %v1714, 0.0
        %v1718 = vadd.f32 %v1638, %v1717
        %s1719 = scalar_lea.vmem %s4, 56
        %v1720 = vld [vmem:[%s1719] sm:$0xff]
        %1721 = vrot.lane.b32.xlu0 %v1161, 111
        %v1722 = vpop.permute.xlu0 %1721
        %v1725 = vsel %vm1162, %v1720, 0
        %1727 = vmatprep.subr.mxu0 0.0
        %1728 = vmatpush1.msra.mxu0 %v1722
        %1729 = vmatprep.subr.mxu0 0.0
        %1730 = vmatpush1.msra.mxu0 0.0
        %1731 = vmatprep.subr.mxu0 0.0
        %1732 = vmatpush1.msra.mxu0 0.0
        %1733 = vmatprep.subr.mxu0 0.0
        %1734 = vmatpush1.msra.mxu0 0.0
        %1735 = vmatprep.subr.mxu0 0.0
        %1736 = vmatpush1.msra.mxu0 0.0
        %1737 = vmatprep.subr.mxu0 0.0
        %1738 = vmatpush1.msra.mxu0 0.0
        %1739 = vmatprep.subr.mxu0 0.0
        %1740 = vmatpush1.msra.mxu0 0.0
        %1741 = vmatprep.subr.mxu0 0.0
        %1742 = vmatpush1.msra.mxu0 0.0
        %1743 = vmatprep.subr.mxu0 0.0
        %1744 = vmatpush1.msra.mxu0 0.0
        %1745 = vmatprep.subr.mxu0 0.0
        %1746 = vmatpush1.msra.mxu0 0.0
        %1747 = vmatprep.subr.mxu0 0.0
        %1748 = vmatpush1.msra.mxu0 0.0
        %1749 = vmatprep.subr.mxu0 0.0
        %1750 = vmatpush1.msra.mxu0 0.0
        %1751 = vmatprep.subr.mxu0 0.0
        %1752 = vmatpush1.msra.mxu0 0.0
        %1753 = vmatprep.subr.mxu0 0.0
        %1754 = vmatpush1.msra.mxu0 0.0
        %1755 = vmatprep.subr.mxu0 0.0
        %1756 = vmatpush1.msra.mxu0 0.0
        %1757 = vmatprep.subr.mxu0 0.0
        %1758 = vmatpush1.msra.mxu0 0.0
        %1759 = vmatprep.subr.mxu0 0.0
        %1760 = vmatpush1.msra.mxu0 0.0
        %1761 = vmatprep.subr.mxu0 0.0
        %1762 = vmatpush1.msra.mxu0 0.0
        %1763 = vmatprep.subr.mxu0 0.0
        %1764 = vmatpush1.msra.mxu0 0.0
        %1765 = vmatprep.subr.mxu0 0.0
        %1766 = vmatpush1.msra.mxu0 0.0
        %1767 = vmatprep.subr.mxu0 0.0
        %1768 = vmatpush1.msra.mxu0 0.0
        %1769 = vmatprep.subr.mxu0 0.0
        %1770 = vmatpush1.msra.mxu0 0.0
        %1771 = vmatprep.subr.mxu0 0.0
        %1772 = vmatpush1.msra.mxu0 0.0
        %1773 = vmatprep.subr.mxu0 0.0
        %1774 = vmatpush1.msra.mxu0 0.0
        %1775 = vmatprep.subr.mxu0 0.0
        %1776 = vmatpush1.msra.mxu0 0.0
        %1777 = vmatprep.subr.mxu0 0.0
        %1778 = vmatpush1.msra.mxu0 0.0
        %1779 = vmatprep.subr.mxu0 0.0
        %1780 = vmatpush1.msra.mxu0 0.0
        %1781 = vmatprep.subr.mxu0 0.0
        %1782 = vmatpush1.msra.mxu0 0.0
        %1783 = vmatprep.subr.mxu0 0.0
        %1784 = vmatpush1.msra.mxu0 0.0
        %1785 = vmatprep.subr.mxu0 0.0
        %1786 = vmatpush1.msra.mxu0 0.0
        %1787 = vmatprep.subr.mxu0 0.0
        %1788 = vmatpush1.msra.mxu0 0.0
        %1789 = vmatprep.subr.mxu0 0.0
        %1790 = vmatpush1.msra.mxu0 0.0
        %1791 = vmatprep.mubr.f32.mxu0 0.0
        %1792 = vmatmul.mubr.f32.gmra.mrb[0].mxu0 %v1725
        %v1793 = vpop.f32.mrb[0].mxu0
        %v1794 = vadd.f32 0.0, %v1793
        %v1795 = vpop.f32.mrb[0].mxu0
        %1796 = vdwg.mxu0
        %v1797 = vadd.f32 %v1718, %v1794
        %s1798 = scalar_lea.vmem %s4, 64
        %v1799 = vld [vmem:[%s1798] sm:$0xff]
        %1800 = vrot.lane.b32.xlu0 %v1161, 110
        %v1801 = vpop.permute.xlu0 %1800
        %v1804 = vsel %vm1162, %v1799, 0
        %1806 = vmatprep.subr.mxu0 0.0
        %1807 = vmatpush1.msra.mxu0 %v1801
        %1808 = vmatprep.subr.mxu0 0.0
        %1809 = vmatpush1.msra.mxu0 0.0
        %1810 = vmatprep.subr.mxu0 0.0
        %1811 = vmatpush1.msra.mxu0 0.0
        %1812 = vmatprep.subr.mxu0 0.0
        %1813 = vmatpush1.msra.mxu0 0.0
        %1814 = vmatprep.subr.mxu0 0.0
        %1815 = vmatpush1.msra.mxu0 0.0
        %1816 = vmatprep.subr.mxu0 0.0
        %1817 = vmatpush1.msra.mxu0 0.0
        %1818 = vmatprep.subr.mxu0 0.0
        %1819 = vmatpush1.msra.mxu0 0.0
        %1820 = vmatprep.subr.mxu0 0.0
        %1821 = vmatpush1.msra.mxu0 0.0
        %1822 = vmatprep.subr.mxu0 0.0
        %1823 = vmatpush1.msra.mxu0 0.0
        %1824 = vmatprep.subr.mxu0 0.0
        %1825 = vmatpush1.msra.mxu0 0.0
        %1826 = vmatprep.subr.mxu0 0.0
        %1827 = vmatpush1.msra.mxu0 0.0
        %1828 = vmatprep.subr.mxu0 0.0
        %1829 = vmatpush1.msra.mxu0 0.0
        %1830 = vmatprep.subr.mxu0 0.0
        %1831 = vmatpush1.msra.mxu0 0.0
        %1832 = vmatprep.subr.mxu0 0.0
        %1833 = vmatpush1.msra.mxu0 0.0
        %1834 = vmatprep.subr.mxu0 0.0
        %1835 = vmatpush1.msra.mxu0 0.0
        %1836 = vmatprep.subr.mxu0 0.0
        %1837 = vmatpush1.msra.mxu0 0.0
        %1838 = vmatprep.subr.mxu0 0.0
        %1839 = vmatpush1.msra.mxu0 0.0
        %1840 = vmatprep.subr.mxu0 0.0
        %1841 = vmatpush1.msra.mxu0 0.0
        %1842 = vmatprep.subr.mxu0 0.0
        %1843 = vmatpush1.msra.mxu0 0.0
        %1844 = vmatprep.subr.mxu0 0.0
        %1845 = vmatpush1.msra.mxu0 0.0
        %1846 = vmatprep.subr.mxu0 0.0
        %1847 = vmatpush1.msra.mxu0 0.0
        %1848 = vmatprep.subr.mxu0 0.0
        %1849 = vmatpush1.msra.mxu0 0.0
        %1850 = vmatprep.subr.mxu0 0.0
        %1851 = vmatpush1.msra.mxu0 0.0
        %1852 = vmatprep.subr.mxu0 0.0
        %1853 = vmatpush1.msra.mxu0 0.0
        %1854 = vmatprep.subr.mxu0 0.0
        %1855 = vmatpush1.msra.mxu0 0.0
        %1856 = vmatprep.subr.mxu0 0.0
        %1857 = vmatpush1.msra.mxu0 0.0
        %1858 = vmatprep.subr.mxu0 0.0
        %1859 = vmatpush1.msra.mxu0 0.0
        %1860 = vmatprep.subr.mxu0 0.0
        %1861 = vmatpush1.msra.mxu0 0.0
        %1862 = vmatprep.subr.mxu0 0.0
        %1863 = vmatpush1.msra.mxu0 0.0
        %1864 = vmatprep.subr.mxu0 0.0
        %1865 = vmatpush1.msra.mxu0 0.0
        %1866 = vmatprep.subr.mxu0 0.0
        %1867 = vmatpush1.msra.mxu0 0.0
        %1868 = vmatprep.subr.mxu0 0.0
        %1869 = vmatpush1.msra.mxu0 0.0
        %1870 = vmatprep.mubr.f32.mxu0 0.0
        %1871 = vmatmul.mubr.f32.gmra.mrb[0].mxu0 %v1804
        %v1872 = vpop.f32.mrb[0].mxu0
        %v1873 = vadd.f32 0.0, %v1872
        %v1874 = vpop.f32.mrb[0].mxu0
        %1875 = vdwg.mxu0
        %v1876 = vsel %vm1397, %v1873, 0.0
        %v1877 = vadd.f32 %v1797, %v1876
        %1879 = vset.pattern.permute.xlu0 0
        %1880 = vperm.xlu0 %1879, %v379
        %v1881 = vpop.permute.xlu0 %1880
        %v1883 = vmul.f32 %v1877, %v1881
        %1885 = vset.pattern.permute.xlu0 0
        %1886 = vperm.xlu0 %1885, %v380
        %v1887 = vpop.permute.xlu0 %1886
        %v1889 = vadd.f32 %v1883, %v1887
        %v1890 = vld [vmem:[%s357] sm:$0xf]
        %v1891 = vld [vmem:[%s7] sm:$0xff]
        %v1893 = vsel %vm409, %v1891, 0
        %v1896 = vsel %vm413, %v1890, 0
        %1898 = vmatprep.subr.mxu0 0.0
        %1899 = vmatpush1.msra.mxu0 %v1896
        %1900 = vmatprep.subr.mxu0 0.0
        %1901 = vmatpush1.msra.mxu0 0.0
        %1902 = vmatprep.subr.mxu0 0.0
        %1903 = vmatpush1.msra.mxu0 0.0
        %1904 = vmatprep.subr.mxu0 0.0
        %1905 = vmatpush1.msra.mxu0 0.0
        %1906 = vmatprep.subr.mxu0 0.0
        %1907 = vmatpush1.msra.mxu0 0.0
        %1908 = vmatprep.subr.mxu0 0.0
        %1909 = vmatpush1.msra.mxu0 0.0
        %1910 = vmatprep.subr.mxu0 0.0
        %1911 = vmatpush1.msra.mxu0 0.0
        %1912 = vmatprep.subr.mxu0 0.0
        %1913 = vmatpush1.msra.mxu0 0.0
        %1914 = vmatprep.subr.mxu0 0.0
        %1915 = vmatpush1.msra.mxu0 0.0
        %1916 = vmatprep.subr.mxu0 0.0
        %1917 = vmatpush1.msra.mxu0 0.0
        %1918 = vmatprep.subr.mxu0 0.0
        %1919 = vmatpush1.msra.mxu0 0.0
        %1920 = vmatprep.subr.mxu0 0.0
        %1921 = vmatpush1.msra.mxu0 0.0
        %1922 = vmatprep.subr.mxu0 0.0
        %1923 = vmatpush1.msra.mxu0 0.0
        %1924 = vmatprep.subr.mxu0 0.0
        %1925 = vmatpush1.msra.mxu0 0.0
        %1926 = vmatprep.subr.mxu0 0.0
        %1927 = vmatpush1.msra.mxu0 0.0
        %1928 = vmatprep.subr.mxu0 0.0
        %1929 = vmatpush1.msra.mxu0 0.0
        %1930 = vmatprep.subr.mxu0 0.0
        %1931 = vmatpush1.msra.mxu0 0.0
        %1932 = vmatprep.subr.mxu0 0.0
        %1933 = vmatpush1.msra.mxu0 0.0
        %1934 = vmatprep.subr.mxu0 0.0
        %1935 = vmatpush1.msra.mxu0 0.0
        %1936 = vmatprep.subr.mxu0 0.0
        %1937 = vmatpush1.msra.mxu0 0.0
        %1938 = vmatprep.subr.mxu0 0.0
        %1939 = vmatpush1.msra.mxu0 0.0
        %1940 = vmatprep.subr.mxu0 0.0
        %1941 = vmatpush1.msra.mxu0 0.0
        %1942 = vmatprep.subr.mxu0 0.0
        %1943 = vmatpush1.msra.mxu0 0.0
        %1944 = vmatprep.subr.mxu0 0.0
        %1945 = vmatpush1.msra.mxu0 0.0
        %1946 = vmatprep.subr.mxu0 0.0
        %1947 = vmatpush1.msra.mxu0 0.0
        %1948 = vmatprep.subr.mxu0 0.0
        %1949 = vmatpush1.msra.mxu0 0.0
        %1950 = vmatprep.subr.mxu0 0.0
        %1951 = vmatpush1.msra.mxu0 0.0
        %1952 = vmatprep.subr.mxu0 0.0
        %1953 = vmatpush1.msra.mxu0 0.0
        %1954 = vmatprep.subr.mxu0 0.0
        %1955 = vmatpush1.msra.mxu0 0.0
        %1956 = vmatprep.subr.mxu0 0.0
        %1957 = vmatpush1.msra.mxu0 0.0
        %1958 = vmatprep.subr.mxu0 0.0
        %1959 = vmatpush1.msra.mxu0 0.0
        %1960 = vmatprep.subr.mxu0 0.0
        %1961 = vmatpush1.msra.mxu0 0.0
        %1962 = vmatprep.mubr.f32.mxu0 0.0
        %1963 = vmatmul.mubr.f32.gmra.mrb[0].mxu0 %v1893
        %v1964 = vpop.f32.mrb[0].mxu0
        %v1965 = vadd.f32 0.0, %v1964
        %v1966 = vpop.f32.mrb[0].mxu0
        %1967 = vdwg.mxu0
        %v1968 = vld [vmem:[%s8] sm:$0xff]
        %1970 = vset.pattern.permute.xlu0 0
        %1971 = vperm.xlu0 %1970, %v1968
        %v1972 = vpop.permute.xlu0 %1971
        %v1974 = vmul.f32 %v1965, %v1972
        %v1975 = vld [vmem:[%s9] sm:$0xff]
        %1977 = vset.pattern.permute.xlu0 0
        %1978 = vperm.xlu0 %1977, %v1975
        %v1979 = vpop.permute.xlu0 %1978
        %v1981 = vadd.f32 %v1974, %v1979
        %v1982 = vadd.f32 %v1889, %v1981
        %v1983 = vmax.f32 %v1982, 0.0
        %vm1984 = vcmask 523264
        %1985 = vst.msk [vmem:[%s352] sm:$0xff] %vm1984, %v1983
        %s1986 = sand.u32 %s247, 1
        %s1987 = scalar_lea.sflag [#allocation5], %s1986
        %s1988 = sand.u32 %s247, 1
        %s1989 = smul.addr %s1988, 8
        %s1990 = scalar_lea.vmem [#allocation4], %s1989
        // Predicated region
        $region61: #{tpu_custom_call.1} parent=59 // pred_check
          %p1991 = pneg %p257
        $region62: #{tpu_custom_call.1} parent=59 // pred_check_branch
          %1993 = sbr.rel (%p1991) target = $region64
        $region63: #{tpu_custom_call.1} parent=59 // pred_region
          %s1995 = ssub.s32 128, 128
          %1996 = vsyncadd %s1987, %s1995
          %s1997 = smul.addr %s24, 128
          %s1998 = scalar_lea.hbm %s10, %s1997
          %s2000 = sshll.u32 %s1990, 4
          %s2001 = int_to_ptr.vmem [resolvable:$true] %s2000
          %2003 = dma.vmem_to_hbm [thread:$0]  %s2001, 128, %s1998, %s1987
        $region64: #{tpu_custom_call.1} parent=59 // pred_fallthru
          _
      $region60: #{tpu_custom_call.1} parent=5 // pred_fallthru
        _
      %p2004 = scmp.le.s32.totalorder 2, %s19
      // Predicated region
      $region65: #{tpu_custom_call.1} parent=5 // pred_check
        %p2005 = pneg %p2004
      $region66: #{tpu_custom_call.1} parent=5 // pred_check_branch
        %2007 = sbr.rel (%p2005) target = $region68
      $region67: #{tpu_custom_call.1} parent=5 // pred_region
        %s2008 = ssub.s32 %s19, 2
        // Predicated region
        $region69: #{tpu_custom_call.1} parent=67 // pred_check
          %p2009 = pneg %p263
        $region70: #{tpu_custom_call.1} parent=67 // pred_check_branch
          %2011 = sbr.rel (%p2009) target = $region72
        $region71: #{tpu_custom_call.1} parent=67 // pred_region
          %s2012 = sand.u32 %s248, 1
          %s2013 = scalar_lea.sflag [#allocation5], %s2012
          %s2014 = sand.u32 %s248, 1
          %s2015 = smul.addr %s2014, 8
          %s2016 = scalar_lea.vmem [#allocation4], %s2015
          %2017 = dma.done %s2013, 128
        $region72: #{tpu_custom_call.1} parent=67 // pred_fallthru
          _
      $region68: #{tpu_custom_call.1} parent=5 // pred_fallthru
        _
    $region6: #{tpu_custom_call.1} parent=1 // loop_footer
      %s23 = sadd.s32 1, %s19
    $region7: #{tpu_custom_call.1} parent=1 // loop_footer_branch
      %18 = sbr.rel target = $region3
    $region8: #{tpu_custom_call.1} parent=1 // loop_exit
      _
    %2018 = vsyncpa [#allocation5], 1
    %s2019 = scalar_lea.sflag [#allocation5], 1
    %2020 = vsyncpa %s2019, 1

</llo_original>
